<compile_context>
chip_gen: v6e
topology: v6e:2x2x1
jax: 0.10.0
libtpu: 0.0.40
codegen_flags: <defaults>
</compile_context>

<pallas_src>
import functools

import jax
import jax.numpy as jnp
from jax.experimental import pallas as pl
from jax.experimental.pallas import tpu as pltpu

LANE = 128
ROW_ALIGN = 16  # bf16 sublane pack; also satisfies the f32 (8,128) rule


def _round_up(v, m):
    return (v + m - 1) // m * m


def teacher_mlp_kernel(x_ref,
                       w1_ref, b1_ref,
                       w2_ref, b2_ref,
                       w3_ref, b3_ref,
                       w4_ref, b4_ref,
                       o_ref):
    """Fused 4-layer MLP forward.

    bf16 operands on the MXU with f32 accumulation; bias + ReLU in f32 on the
    VPU; intermediates re-cast to bf16 to feed the next matmul natively."""
    x = x_ref[...].astype(jnp.bfloat16)          # cast in-register, no HBM copy

    h = jnp.dot(x, w1_ref[...], preferred_element_type=jnp.float32) + b1_ref[...]
    h = jnp.maximum(h, 0.0).astype(jnp.bfloat16)

    h = jnp.dot(h, w2_ref[...], preferred_element_type=jnp.float32) + b2_ref[...]
    h = jnp.maximum(h, 0.0).astype(jnp.bfloat16)

    h = jnp.dot(h, w3_ref[...], preferred_element_type=jnp.float32) + b3_ref[...]
    h = jnp.maximum(h, 0.0).astype(jnp.bfloat16)

    out = jnp.dot(h, w4_ref[...], preferred_element_type=jnp.float32) + b4_ref[...]
    o_ref[...] = out.astype(o_ref.dtype)         # lane-dense (block_b, 128) store


def prepare_teacher_params(params):
    """One-time parameter prep (do NOT call per forward).

    Casts weights to bf16, biases to f32, and zero-pads the final layer's
    output dim to a lane-dense 128 so the kernel's stores are unmasked.
    Input: [(w1, b1), ..., (w4, b4)] with w_i of shape (in, out), b_i (1, out).
    """
    (w1, b1), (w2, b2), (w3, b3), (w4, b4) = params
    nc = w4.shape[1]
    nc_pad = _round_up(nc, LANE)
    w4p = jnp.pad(w4, ((0, 0), (0, nc_pad - nc))).astype(jnp.bfloat16)
    b4p = jnp.pad(b4, ((0, 0), (0, nc_pad - nc))).astype(jnp.float32)
    return (w1.astype(jnp.bfloat16), b1.astype(jnp.float32),
            w2.astype(jnp.bfloat16), b2.astype(jnp.float32),
            w3.astype(jnp.bfloat16), b3.astype(jnp.float32),
            w4p, b4p)


def _default_block_b(B):
    if B <= 256:
        return B  # single tile; block == full batch is always layout-legal
    # Large tiles to amortize ~0.35us/grid-step, but keep >=2 grid steps so
    # both v7x TensorCores get work; rounded to the bf16 sublane pack.
    return min(2048, _round_up(pl.cdiv(B, 2), ROW_ALIGN))


def teacher_model_forward(x, prepared_params, *, num_classes=10,
                          block_b=None, out_dtype=jnp.float32):
    """Pallas wrapper. `prepared_params` comes from prepare_teacher_params().

    Weights (~1.6 MiB bf16) + biases are grid-invariant, single-buffered, and
    stay VMEM-resident; only x / out tiles stream over the batch grid."""
    w1p, b1p, w2p, b2p, w3p, b3p, w4p, b4p = prepared_params
    B, in_dim = x.shape
    assert in_dim == w1p.shape[0], "input feature dim mismatch"
    h1, h2, h3, nc_pad = w1p.shape[1], w2p.shape[1], w3p.shape[1], w4p.shape[1]

    if block_b is None:
        block_b = _default_block_b(B)
    elif block_b < B:
        block_b = max(ROW_ALIGN, _round_up(block_b, ROW_ALIGN))
    else:
        block_b = B

    grid = (pl.cdiv(B, block_b),)

    def const_spec(shape):
        # Grid-invariant operand: fetched once, never re-DMA'd -> a second
        # pipeline buffer would be pure VMEM waste.
        return pl.BlockSpec(shape, lambda i: (0, 0),
                            pipeline_mode=pl.Buffered(1))

    out = pl.pallas_call(
        teacher_mlp_kernel,
        out_shape=jax.ShapeDtypeStruct((B, nc_pad), out_dtype),
        grid_spec=pltpu.PrefetchScalarGridSpec(
            num_scalar_prefetch=0,
            grid=grid,
            in_specs=[
                pl.BlockSpec((block_b, in_dim), lambda i: (i, 0)),  # x tile
                const_spec((in_dim, h1)), const_spec((1, h1)),
                const_spec((h1, h2)),     const_spec((1, h2)),
                const_spec((h2, h3)),     const_spec((1, h3)),
                const_spec((h3, nc_pad)), const_spec((1, nc_pad)),
            ],
            out_specs=pl.BlockSpec((block_b, nc_pad), lambda i: (i, 0)),
        ),
        compiler_params=pltpu.CompilerParams(
            dimension_semantics=("parallel",),   # batch tiles shard across TCs
            vmem_limit_bytes=64 << 20,           # room for 2K-row tiles on all gens
        ),
    )(x, w1p, b1p, w2p, b2p, w3p, b3p, w4p, b4p)

    # Drop the padded lanes. Under jit this slice fuses with the consumer.
    return out[:, :num_classes]


def init_teacher_params(key, input_size=784, hidden_size=512, num_classes=10):
    """Deterministic synthetic parameters matching TeacherModel's layer shapes.
    Weights stored as (in, out) (i.e. PyTorch W.T); biases as (1, out)."""
    dims = [(input_size, hidden_size),
            (hidden_size, hidden_size),
            (hidden_size, hidden_size // 2),
            (hidden_size // 2, num_classes)]
    params = []
    for (d_in, d_out) in dims:
        key, kw, kb = jax.random.split(key, 3)
        bound = 1.0 / jnp.sqrt(d_in)  # same scale as PyTorch's default Linear init
        w = jax.random.uniform(kw, (d_in, d_out), jnp.float32, -bound, bound)
        b = jax.random.uniform(kb, (1, d_out), jnp.float32, -bound, bound)
        params.append((w, b))
    return params


def teacher_model_ref(x, params):
    """Plain-JAX reference mimicking the kernel's bf16-weight / f32-accumulate math."""
    h = x.astype(jnp.bfloat16)
    (w1, b1), (w2, b2), (w3, b3), (w4, b4) = params
    for (w, b) in ((w1, b1), (w2, b2), (w3, b3)):
        h = jnp.dot(h, w.astype(jnp.bfloat16),
                    preferred_element_type=jnp.float32) + b.astype(jnp.float32)
        h = jnp.maximum(h, 0.0).astype(jnp.bfloat16)
    return (jnp.dot(h, w4.astype(jnp.bfloat16),
                    preferred_element_type=jnp.float32) + b4.astype(jnp.float32))


if __name__ == "__main__":
    key = jax.random.PRNGKey(0)
    key, kx = jax.random.split(key)

    batch_size = 32
    input_size, hidden_size, num_classes = 784, 512, 10

    x = jax.random.normal(kx, (batch_size, input_size), jnp.float32)
    params = init_teacher_params(key, input_size, hidden_size, num_classes)

    # One-time prep: pad/cast weights (hoisted out of the per-call path).
    prepared = prepare_teacher_params(params)

    fwd = jax.jit(functools.partial(teacher_model_forward, num_classes=num_classes))
    out = jax.block_until_ready(fwd(x, prepared))

    ref = teacher_model_ref(x, params)
    assert out.shape == (batch_size, num_classes)
    assert out.dtype == jnp.float32
    assert jnp.allclose(out, ref, atol=2e-2, rtol=2e-2), "mismatch vs reference"

    print("KERNEL_OK")
</pallas_src>

<mosaic_0001>
module attributes {stable_mosaic.version = 11 : i64} {
  func.func @teacher_mlp_kernel(%arg0: i32, %arg1: memref<32x784xf32, #tpu.memory_space<vmem>>, %arg2: memref<784x512xbf16, #tpu.memory_space<vmem>>, %arg3: memref<1x512xf32, #tpu.memory_space<vmem>>, %arg4: memref<512x512xbf16, #tpu.memory_space<vmem>>, %arg5: memref<1x512xf32, #tpu.memory_space<vmem>>, %arg6: memref<512x256xbf16, #tpu.memory_space<vmem>>, %arg7: memref<1x256xf32, #tpu.memory_space<vmem>>, %arg8: memref<256x128xbf16, #tpu.memory_space<vmem>>, %arg9: memref<1x128xf32, #tpu.memory_space<vmem>>, %arg10: memref<32x128xf32, #tpu.memory_space<vmem>>) attributes {dimension_semantics = [#tpu.dimension_semantics<parallel>], iteration_bounds = array<i64: 1>, scalar_prefetch = 0 : i64, scratch_operands = 0 : i64, tpu.core_type = #tpu.core_type<tc>, window_params = [{transform_indices = @transform_0, window_bounds = array<i64: 32, 784>}, {pipeline_mode = #tpu.pipeline_mode<synchronous>, transform_indices = @transform_1, window_bounds = array<i64: 784, 512>}, {pipeline_mode = #tpu.pipeline_mode<synchronous>, transform_indices = @transform_2, window_bounds = array<i64: 1, 512>}, {pipeline_mode = #tpu.pipeline_mode<synchronous>, transform_indices = @transform_3, window_bounds = array<i64: 512, 512>}, {pipeline_mode = #tpu.pipeline_mode<synchronous>, transform_indices = @transform_4, window_bounds = array<i64: 1, 512>}, {pipeline_mode = #tpu.pipeline_mode<synchronous>, transform_indices = @transform_5, window_bounds = array<i64: 512, 256>}, {pipeline_mode = #tpu.pipeline_mode<synchronous>, transform_indices = @transform_6, window_bounds = array<i64: 1, 256>}, {pipeline_mode = #tpu.pipeline_mode<synchronous>, transform_indices = @transform_7, window_bounds = array<i64: 256, 128>}, {pipeline_mode = #tpu.pipeline_mode<synchronous>, transform_indices = @transform_8, window_bounds = array<i64: 1, 128>}, {transform_indices = @transform_9, window_bounds = array<i64: 32, 128>}]} {
    %c0 = arith.constant 0 : index
    %c0_0 = arith.constant 0 : index
    %0 = vector.load %arg1[%c0, %c0_0] : memref<32x784xf32, #tpu.memory_space<vmem>>, vector<32x784xf32>
    %1 = arith.truncf %0 : vector<32x784xf32> to vector<32x784xbf16>
    %c0_1 = arith.constant 0 : index
    %c0_2 = arith.constant 0 : index
    %2 = vector.load %arg2[%c0_1, %c0_2] : memref<784x512xbf16, #tpu.memory_space<vmem>>, vector<784x512xbf16>
    %cst = arith.constant dense<0.000000e+00> : vector<32x512xf32>
    %3 = tpu.matmul %1, %2, %cst {dimension_numbers = #tpu.dot_dimension_numbers<[1], [0], [0], [1], [0, 0, 1, 1], [], []>} : vector<32x784xbf16>, vector<784x512xbf16>, vector<32x512xf32> -> vector<32x512xf32>
    %c0_3 = arith.constant 0 : index
    %c0_4 = arith.constant 0 : index
    %4 = vector.load %arg3[%c0_3, %c0_4] : memref<1x512xf32, #tpu.memory_space<vmem>>, vector<1x512xf32>
    %5 = vector.broadcast %4 : vector<1x512xf32> to vector<32x512xf32>
    %6 = arith.addf %3, %5 : vector<32x512xf32>
    %cst_5 = arith.constant 0.000000e+00 : f32
    %7 = vector.broadcast %cst_5 : f32 to vector<32x512xf32>
    %8 = arith.maximumf %6, %7 : vector<32x512xf32>
    %9 = arith.truncf %8 : vector<32x512xf32> to vector<32x512xbf16>
    %c0_6 = arith.constant 0 : index
    %c0_7 = arith.constant 0 : index
    %10 = vector.load %arg4[%c0_6, %c0_7] : memref<512x512xbf16, #tpu.memory_space<vmem>>, vector<512x512xbf16>
    %cst_8 = arith.constant dense<0.000000e+00> : vector<32x512xf32>
    %11 = tpu.matmul %9, %10, %cst_8 {dimension_numbers = #tpu.dot_dimension_numbers<[1], [0], [0], [1], [0, 0, 1, 1], [], []>} : vector<32x512xbf16>, vector<512x512xbf16>, vector<32x512xf32> -> vector<32x512xf32>
    %c0_9 = arith.constant 0 : index
    %c0_10 = arith.constant 0 : index
    %12 = vector.load %arg5[%c0_9, %c0_10] : memref<1x512xf32, #tpu.memory_space<vmem>>, vector<1x512xf32>
    %13 = vector.broadcast %12 : vector<1x512xf32> to vector<32x512xf32>
    %14 = arith.addf %11, %13 : vector<32x512xf32>
    %cst_11 = arith.constant 0.000000e+00 : f32
    %15 = vector.broadcast %cst_11 : f32 to vector<32x512xf32>
    %16 = arith.maximumf %14, %15 : vector<32x512xf32>
    %17 = arith.truncf %16 : vector<32x512xf32> to vector<32x512xbf16>
    %c0_12 = arith.constant 0 : index
    %c0_13 = arith.constant 0 : index
    %18 = vector.load %arg6[%c0_12, %c0_13] : memref<512x256xbf16, #tpu.memory_space<vmem>>, vector<512x256xbf16>
    %cst_14 = arith.constant dense<0.000000e+00> : vector<32x256xf32>
    %19 = tpu.matmul %17, %18, %cst_14 {dimension_numbers = #tpu.dot_dimension_numbers<[1], [0], [0], [1], [0, 0, 1, 1], [], []>} : vector<32x512xbf16>, vector<512x256xbf16>, vector<32x256xf32> -> vector<32x256xf32>
    %c0_15 = arith.constant 0 : index
    %c0_16 = arith.constant 0 : index
    %20 = vector.load %arg7[%c0_15, %c0_16] : memref<1x256xf32, #tpu.memory_space<vmem>>, vector<1x256xf32>
    %21 = vector.broadcast %20 : vector<1x256xf32> to vector<32x256xf32>
    %22 = arith.addf %19, %21 : vector<32x256xf32>
    %cst_17 = arith.constant 0.000000e+00 : f32
    %23 = vector.broadcast %cst_17 : f32 to vector<32x256xf32>
    %24 = arith.maximumf %22, %23 : vector<32x256xf32>
    %25 = arith.truncf %24 : vector<32x256xf32> to vector<32x256xbf16>
    %c0_18 = arith.constant 0 : index
    %c0_19 = arith.constant 0 : index
    %26 = vector.load %arg8[%c0_18, %c0_19] : memref<256x128xbf16, #tpu.memory_space<vmem>>, vector<256x128xbf16>
    %cst_20 = arith.constant dense<0.000000e+00> : vector<32x128xf32>
    %27 = tpu.matmul %25, %26, %cst_20 {dimension_numbers = #tpu.dot_dimension_numbers<[1], [0], [0], [1], [0, 0, 1, 1], [], []>} : vector<32x256xbf16>, vector<256x128xbf16>, vector<32x128xf32> -> vector<32x128xf32>
    %c0_21 = arith.constant 0 : index
    %c0_22 = arith.constant 0 : index
    %28 = vector.load %arg9[%c0_21, %c0_22] : memref<1x128xf32, #tpu.memory_space<vmem>>, vector<1x128xf32>
    %29 = vector.broadcast %28 : vector<1x128xf32> to vector<32x128xf32>
    %30 = arith.addf %27, %29 : vector<32x128xf32>
    %c0_23 = arith.constant 0 : index
    %c0_24 = arith.constant 0 : index
    %31 = vector.load %arg10[%c0_23, %c0_24] : memref<32x128xf32, #tpu.memory_space<vmem>>, vector<32x128xf32>
    tpu.vector_store %arg10[%c0_23, %c0_24], %30 {strides = array<i32>} : memref<32x128xf32, #tpu.memory_space<vmem>>, vector<32x128xf32>,
    return
  }
  func.func @transform_0(%arg0: i32) -> (i32, i32) {
    %c0_i32 = arith.constant 0 : i32
    %c0_i32_0 = arith.constant 0 : i32
    return %arg0, %c0_i32 : i32, i32
  }
  func.func @transform_1(%arg0: i32) -> (i32, i32) {
    %c0_i32 = arith.constant 0 : i32
    %c0_i32_0 = arith.constant 0 : i32
    %c0_i32_1 = arith.constant 0 : i32
    return %c0_i32, %c0_i32_0 : i32, i32
  }
  func.func @transform_2(%arg0: i32) -> (i32, i32) {
    %c0_i32 = arith.constant 0 : i32
    %c0_i32_0 = arith.constant 0 : i32
    %c0_i32_1 = arith.constant 0 : i32
    return %c0_i32, %c0_i32_0 : i32, i32
  }
  func.func @transform_3(%arg0: i32) -> (i32, i32) {
    %c0_i32 = arith.constant 0 : i32
    %c0_i32_0 = arith.constant 0 : i32
    %c0_i32_1 = arith.constant 0 : i32
    return %c0_i32, %c0_i32_0 : i32, i32
  }
  func.func @transform_4(%arg0: i32) -> (i32, i32) {
    %c0_i32 = arith.constant 0 : i32
    %c0_i32_0 = arith.constant 0 : i32
    %c0_i32_1 = arith.constant 0 : i32
    return %c0_i32, %c0_i32_0 : i32, i32
  }
  func.func @transform_5(%arg0: i32) -> (i32, i32) {
    %c0_i32 = arith.constant 0 : i32
    %c0_i32_0 = arith.constant 0 : i32
    %c0_i32_1 = arith.constant 0 : i32
    return %c0_i32, %c0_i32_0 : i32, i32
  }
  func.func @transform_6(%arg0: i32) -> (i32, i32) {
    %c0_i32 = arith.constant 0 : i32
    %c0_i32_0 = arith.constant 0 : i32
    %c0_i32_1 = arith.constant 0 : i32
    return %c0_i32, %c0_i32_0 : i32, i32
  }
  func.func @transform_7(%arg0: i32) -> (i32, i32) {
    %c0_i32 = arith.constant 0 : i32
    %c0_i32_0 = arith.constant 0 : i32
    %c0_i32_1 = arith.constant 0 : i32
    return %c0_i32, %c0_i32_0 : i32, i32
  }
  func.func @transform_8(%arg0: i32) -> (i32, i32) {
    %c0_i32 = arith.constant 0 : i32
    %c0_i32_0 = arith.constant 0 : i32
    %c0_i32_1 = arith.constant 0 : i32
    return %c0_i32, %c0_i32_0 : i32, i32
  }
  func.func @transform_9(%arg0: i32) -> (i32, i32) {
    %c0_i32 = arith.constant 0 : i32
    %c0_i32_0 = arith.constant 0 : i32
    return %arg0, %c0_i32 : i32, i32
  }
}

</mosaic_0001>

<llo_original>
// kernel: teacher_model_forward.1
$region0: #{teacher_model_forward.1}
  #allocation0 [shape = 'u32[]', space=smem, size = 0x4, offset = 0x4, fixed_abs, tag = 'smem constant byte address 0x4 - core index']
  #allocation1 [shape = 'u32[144,128]{1,0:T(1,128)}', space=vmem, size = 0x12000, scoped, tag = 'internal scratch']
  %s0 = inlined_call_operand.hbm [shape: f32[32,784], index: 0, kind: input, shape index: {}]
  %s1 = inlined_call_operand.hbm [shape: bf16[784,512], index: 1, kind: input, shape index: {}]
  %s2 = inlined_call_operand.hbm [shape: f32[1,512], index: 2, kind: input, shape index: {}]
  %s3 = inlined_call_operand.hbm [shape: bf16[512,512], index: 3, kind: input, shape index: {}]
  %s4 = inlined_call_operand.vmem [shape: f32[1,512], index: 4, kind: input, shape index: {}]
  %s5 = inlined_call_operand.hbm [shape: bf16[512,256], index: 5, kind: input, shape index: {}]
  %s6 = inlined_call_operand.vmem [shape: f32[1,256], index: 6, kind: input, shape index: {}]
  %s7 = inlined_call_operand.hbm [shape: bf16[256,128], index: 7, kind: input, shape index: {}]
  %s8 = inlined_call_operand.vmem [shape: f32[1,128], index: 8, kind: input, shape index: {}]
  %s9 = inlined_call_operand.vmem [shape: f32[32,128], index: 9, kind: output, shape index: {}]
  %s10 = sld [smem:[#allocation0]]
  $region70: #{teacher_model_forward.1} parent=0
    _
  %s12 = ssub.s32 1, %s10
  %s13 = scalar_select 0, %s12, %s10
  $region1: #{teacher_model_forward.1} parent=0
    #allocation2 [shape = 'u8[114688]{0}', space=vmem, size = 0x1c000, scoped, tag = 'input window, operand 0, single buffered']
    #allocation3 [shape = 's32[1]{0}', space=sflag, size = 0x4, scoped, tag = 'scoped memory for teacher_model_forward.1']
    #allocation4 [shape = 'u8[802816]{0}', space=vmem, size = 0xc4000, scoped, tag = 'input window, operand 1, single buffered']
    #allocation5 [shape = 's32[1]{0}', space=sflag, size = 0x4, scoped, tag = 'scoped memory for teacher_model_forward.1']
    #allocation6 [shape = 'u8[2048]{0}', space=vmem, size = 0x800, scoped, tag = 'input window, operand 2, single buffered']
    #allocation7 [shape = 'u8[524288]{0}', space=vmem, size = 0x80000, scoped, tag = 'input window, operand 3, single buffered']
    #allocation8 [shape = 's32[1]{0}', space=sflag, size = 0x4, scoped, tag = 'scoped memory for teacher_model_forward.1']
    #allocation9 [shape = 'u8[262144]{0}', space=vmem, size = 0x40000, scoped, tag = 'input window, operand 5, single buffered']
    #allocation10 [shape = 'u8[65536]{0}', space=vmem, size = 0x10000, scoped, tag = 'input window, operand 7, single buffered']
    #allocation11 [shape = 's32[1]{0}', space=sflag, size = 0x4, scoped, tag = 'scoped memory for teacher_model_forward.1']
    %14 = vsyncpa [#allocation3], 0
    %15 = vsyncpa [#allocation5], 0
    %16 = vsyncpa [#allocation8], 0
    %17 = vsyncpa [#allocation11], 0
    // Predicated region
    $region2: #{teacher_model_forward.1} parent=1 // pred_check
      _
    $region3: #{teacher_model_forward.1} parent=1 // pred_check_branch
      %19 = sbr.rel (0) target = $region5
    $region4: #{teacher_model_forward.1} parent=1 // pred_region
      %s21 = ssub.s32 3584, 3584
      %22 = vsyncadd [#allocation3], %s21
      %s23 = sshll.u32 [#allocation2], 4
      %s24 = int_to_ptr.vmem [resolvable:$true] %s23
      %29 = dma.hbm_to_vmem [thread:$0]  %s0, 3584, %s24, [#allocation3], 896, 896, 56
    $region5: #{teacher_model_forward.1} parent=1 // pred_fallthru
      _
    // Predicated region
    $region6: #{teacher_model_forward.1} parent=1 // pred_check
      _
    $region7: #{teacher_model_forward.1} parent=1 // pred_check_branch
      %31 = sbr.rel (0) target = $region9
    $region8: #{teacher_model_forward.1} parent=1 // pred_region
      %s33 = ssub.s32 25088, 25088
      %34 = vsyncadd [#allocation5], %s33
      %s35 = sshll.u32 [#allocation4], 4
      %s36 = int_to_ptr.vmem [resolvable:$true] %s35
      %41 = dma.hbm_to_vmem [thread:$0]  %s1, 25088, %s36, [#allocation5], 256, 256, 16
    $region9: #{teacher_model_forward.1} parent=1 // pred_fallthru
      _
    // Predicated region
    $region10: #{teacher_model_forward.1} parent=1 // pred_check
      _
    $region11: #{teacher_model_forward.1} parent=1 // pred_check_branch
      %43 = sbr.rel (0) target = $region13
    $region12: #{teacher_model_forward.1} parent=1 // pred_region
      %s45 = ssub.s32 64, 64
      %46 = vsyncadd [#allocation5], %s45
      %s48 = sshll.u32 [#allocation6], 4
      %s49 = int_to_ptr.vmem [resolvable:$true] %s48
      %51 = dma.hbm_to_vmem [thread:$0]  %s2, 64, %s49, [#allocation5]
    $region13: #{teacher_model_forward.1} parent=1 // pred_fallthru
      _
    // Predicated region
    $region14: #{teacher_model_forward.1} parent=1 // pred_check
      _
    $region15: #{teacher_model_forward.1} parent=1 // pred_check_branch
      %53 = sbr.rel (0) target = $region17
    $region16: #{teacher_model_forward.1} parent=1 // pred_region
      %s55 = ssub.s32 16384, 16384
      %56 = vsyncadd [#allocation8], %s55
      %s57 = sshll.u32 [#allocation7], 4
      %s58 = int_to_ptr.vmem [resolvable:$true] %s57
      %63 = dma.hbm_to_vmem [thread:$0]  %s3, 16384, %s58, [#allocation8], 256, 256, 16
    $region17: #{teacher_model_forward.1} parent=1 // pred_fallthru
      _
    // Predicated region
    $region18: #{teacher_model_forward.1} parent=1 // pred_check
      _
    $region19: #{teacher_model_forward.1} parent=1 // pred_check_branch
      %65 = sbr.rel (0) target = $region21
    $region20: #{teacher_model_forward.1} parent=1 // pred_region
      _
    $region21: #{teacher_model_forward.1} parent=1 // pred_fallthru
      _
    // Predicated region
    $region22: #{teacher_model_forward.1} parent=1 // pred_check
      _
    $region23: #{teacher_model_forward.1} parent=1 // pred_check_branch
      %67 = sbr.rel (0) target = $region25
    $region24: #{teacher_model_forward.1} parent=1 // pred_region
      %s69 = ssub.s32 8192, 8192
      %70 = vsyncadd [#allocation8], %s69
      %s71 = sshll.u32 [#allocation9], 4
      %s72 = int_to_ptr.vmem [resolvable:$true] %s71
      %77 = dma.hbm_to_vmem [thread:$0]  %s5, 8192, %s72, [#allocation8], 128, 128, 8
    $region25: #{teacher_model_forward.1} parent=1 // pred_fallthru
      _
    // Predicated region
    $region26: #{teacher_model_forward.1} parent=1 // pred_check
      _
    $region27: #{teacher_model_forward.1} parent=1 // pred_check_branch
      %79 = sbr.rel (0) target = $region29
    $region28: #{teacher_model_forward.1} parent=1 // pred_region
      _
    $region29: #{teacher_model_forward.1} parent=1 // pred_fallthru
      _
    // Predicated region
    $region30: #{teacher_model_forward.1} parent=1 // pred_check
      _
    $region31: #{teacher_model_forward.1} parent=1 // pred_check_branch
      %81 = sbr.rel (0) target = $region33
    $region32: #{teacher_model_forward.1} parent=1 // pred_region
      %s83 = ssub.s32 2048, 2048
      %84 = vsyncadd [#allocation11], %s83
      %s85 = sshll.u32 [#allocation10], 4
      %s86 = int_to_ptr.vmem [resolvable:$true] %s85
      %91 = dma.hbm_to_vmem [thread:$0]  %s7, 2048, %s86, [#allocation11], 64, 64, 4
    $region33: #{teacher_model_forward.1} parent=1 // pred_fallthru
      _
    // Predicated region
    $region34: #{teacher_model_forward.1} parent=1 // pred_check
      _
    $region35: #{teacher_model_forward.1} parent=1 // pred_check_branch
      %93 = sbr.rel (0) target = $region37
    $region36: #{teacher_model_forward.1} parent=1 // pred_region
      _
    $region37: #{teacher_model_forward.1} parent=1 // pred_fallthru
      _
    // Predicated region
    $region38: #{teacher_model_forward.1} parent=1 // pred_check
      _
    $region39: #{teacher_model_forward.1} parent=1 // pred_check_branch
      %95 = sbr.rel (0) target = $region41
    $region40: #{teacher_model_forward.1} parent=1 // pred_region
      %96 = dma.done [#allocation3], 3584
    $region41: #{teacher_model_forward.1} parent=1 // pred_fallthru
      _
    // Predicated region
    $region42: #{teacher_model_forward.1} parent=1 // pred_check
      _
    $region43: #{teacher_model_forward.1} parent=1 // pred_check_branch
      %98 = sbr.rel (0) target = $region45
    $region44: #{teacher_model_forward.1} parent=1 // pred_region
      %99 = dma.done [#allocation5], 25088
    $region45: #{teacher_model_forward.1} parent=1 // pred_fallthru
      _
    // Predicated region
    $region46: #{teacher_model_forward.1} parent=1 // pred_check
      _
    $region47: #{teacher_model_forward.1} parent=1 // pred_check_branch
      %101 = sbr.rel (0) target = $region49
    $region48: #{teacher_model_forward.1} parent=1 // pred_region
      %102 = dma.done [#allocation5], 64
    $region49: #{teacher_model_forward.1} parent=1 // pred_fallthru
      _
    // Predicated region
    $region50: #{teacher_model_forward.1} parent=1 // pred_check
      _
    $region51: #{teacher_model_forward.1} parent=1 // pred_check_branch
      %104 = sbr.rel (0) target = $region53
    $region52: #{teacher_model_forward.1} parent=1 // pred_region
      %105 = dma.done [#allocation8], 16384
    $region53: #{teacher_model_forward.1} parent=1 // pred_fallthru
      _
    // Predicated region
    $region54: #{teacher_model_forward.1} parent=1 // pred_check
      _
    $region55: #{teacher_model_forward.1} parent=1 // pred_check_branch
      %107 = sbr.rel (0) target = $region57
    $region56: #{teacher_model_forward.1} parent=1 // pred_region
      %108 = dma.done [#allocation8], 8192
    $region57: #{teacher_model_forward.1} parent=1 // pred_fallthru
      _
    // Predicated region
    $region58: #{teacher_model_forward.1} parent=1 // pred_check
      _
    $region59: #{teacher_model_forward.1} parent=1 // pred_check_branch
      %110 = sbr.rel (0) target = $region61
    $region60: #{teacher_model_forward.1} parent=1 // pred_region
      %111 = dma.done [#allocation11], 2048
    $region61: #{teacher_model_forward.1} parent=1 // pred_fallthru
      _
    %v113 = vld [vmem:[#allocation2] sm:$0xff]
    %v114 = vld [vmem:[#allocation2 + $0x8] sm:$0xff]
    %v115 = vld [vmem:[#allocation2 + $0x10] sm:$0xff]
    %v116 = vld [vmem:[#allocation2 + $0x18] sm:$0xff]
    %v117 = vld [vmem:[#allocation2 + $0x20] sm:$0xff]
    %v118 = vld [vmem:[#allocation2 + $0x28] sm:$0xff]
    %v119 = vld [vmem:[#allocation2 + $0x30] sm:$0xff]
    %v120 = vld [vmem:[#allocation2 + $0x38] sm:$0xff]
    %v121 = vld [vmem:[#allocation2 + $0x40] sm:$0xff]
    %v122 = vld [vmem:[#allocation2 + $0x48] sm:$0xff]
    %v123 = vld [vmem:[#allocation2 + $0x50] sm:$0xff]
    %v124 = vld [vmem:[#allocation2 + $0x58] sm:$0xff]
    %v125 = vld [vmem:[#allocation2 + $0x60] sm:$0xff]
    %v126 = vld [vmem:[#allocation2 + $0x68] sm:$0xff]
    %v127 = vld [vmem:[#allocation2 + $0x70] sm:$0xff]
    %v128 = vld [vmem:[#allocation2 + $0x78] sm:$0xff]
    %v129 = vld [vmem:[#allocation2 + $0x80] sm:$0xff]
    %v130 = vld [vmem:[#allocation2 + $0x88] sm:$0xff]
    %v131 = vld [vmem:[#allocation2 + $0x90] sm:$0xff]
    %v132 = vld [vmem:[#allocation2 + $0x98] sm:$0xff]
    %v133 = vld [vmem:[#allocation2 + $0xa0] sm:$0xff]
    %v134 = vld [vmem:[#allocation2 + $0xa8] sm:$0xff]
    %v135 = vld [vmem:[#allocation2 + $0xb0] sm:$0xff]
    %v136 = vld [vmem:[#allocation2 + $0xb8] sm:$0xff]
    %v137 = vld [vmem:[#allocation2 + $0xc0] sm:$0xff]
    %v138 = vld [vmem:[#allocation2 + $0xc8] sm:$0xff]
    %v139 = vld [vmem:[#allocation2 + $0xd0] sm:$0xff]
    %v140 = vld [vmem:[#allocation2 + $0xd8] sm:$0xff]
    %v141 = vpack.c.bf16 %v120, %v113
    %v142 = vpack.c.bf16 %v121, %v114
    %v143 = vpack.c.bf16 %v122, %v115
    %v144 = vpack.c.bf16 %v123, %v116
    %v145 = vpack.c.bf16 %v124, %v117
    %v146 = vpack.c.bf16 %v125, %v118
    %v147 = vpack.c.bf16 %v126, %v119
    %v148 = vpack.c.bf16 %v134, %v127
    %v149 = vpack.c.bf16 %v135, %v128
    %v150 = vpack.c.bf16 %v136, %v129
    %v151 = vpack.c.bf16 %v137, %v130
    %v152 = vpack.c.bf16 %v138, %v131
    %v153 = vpack.c.bf16 %v139, %v132
    %v154 = vpack.c.bf16 %v140, %v133
    %v155 = vld [vmem:[#allocation4] sm:$0xff]
    %v156 = vld [vmem:[#allocation4 + $0x8] sm:$0xff]
    %v157 = vld [vmem:[#allocation4 + $0x10] sm:$0xff]
    %v158 = vld [vmem:[#allocation4 + $0x18] sm:$0xff]
    %v159 = vld [vmem:[#allocation4 + $0x20] sm:$0xff]
    %v160 = vld [vmem:[#allocation4 + $0x28] sm:$0xff]
    %v161 = vld [vmem:[#allocation4 + $0x30] sm:$0xff]
    %v162 = vld [vmem:[#allocation4 + $0x38] sm:$0xff]
    %v163 = vld [vmem:[#allocation4 + $0x40] sm:$0xff]
    %v164 = vld [vmem:[#allocation4 + $0x48] sm:$0xff]
    %v165 = vld [vmem:[#allocation4 + $0x50] sm:$0xff]
    %v166 = vld [vmem:[#allocation4 + $0x58] sm:$0xff]
    %v167 = vld [vmem:[#allocation4 + $0x60] sm:$0xff]
    %v168 = vld [vmem:[#allocation4 + $0x68] sm:$0xff]
    %v169 = vld [vmem:[#allocation4 + $0x70] sm:$0xff]
    %v170 = vld [vmem:[#allocation4 + $0x78] sm:$0xff]
    %v171 = vld [vmem:[#allocation4 + $0x80] sm:$0xff]
    %v172 = vld [vmem:[#allocation4 + $0x88] sm:$0xff]
    %v173 = vld [vmem:[#allocation4 + $0x90] sm:$0xff]
    %v174 = vld [vmem:[#allocation4 + $0x98] sm:$0xff]
    %v175 = vld [vmem:[#allocation4 + $0xa0] sm:$0xff]
    %v176 = vld [vmem:[#allocation4 + $0xa8] sm:$0xff]
    %v177 = vld [vmem:[#allocation4 + $0xb0] sm:$0xff]
    %v178 = vld [vmem:[#allocation4 + $0xb8] sm:$0xff]
    %v179 = vld [vmem:[#allocation4 + $0xc0] sm:$0xff]
    %v180 = vld [vmem:[#allocation4 + $0xc8] sm:$0xff]
    %v181 = vld [vmem:[#allocation4 + $0xd0] sm:$0xff]
    %v182 = vld [vmem:[#allocation4 + $0xd8] sm:$0xff]
    %v183 = vld [vmem:[#allocation4 + $0xe0] sm:$0xff]
    %v184 = vld [vmem:[#allocation4 + $0xe8] sm:$0xff]
    %v185 = vld [vmem:[#allocation4 + $0xf0] sm:$0xff]
    %v186 = vld [vmem:[#allocation4 + $0xf8] sm:$0xff]
    %v187 = vld [vmem:[#allocation4 + $0x100] sm:$0xff]
    %v188 = vld [vmem:[#allocation4 + $0x108] sm:$0xff]
    %v189 = vld [vmem:[#allocation4 + $0x110] sm:$0xff]
    %v190 = vld [vmem:[#allocation4 + $0x118] sm:$0xff]
    %v191 = vld [vmem:[#allocation4 + $0x120] sm:$0xff]
    %v192 = vld [vmem:[#allocation4 + $0x128] sm:$0xff]
    %v193 = vld [vmem:[#allocation4 + $0x130] sm:$0xff]
    %v194 = vld [vmem:[#allocation4 + $0x138] sm:$0xff]
    %v195 = vld [vmem:[#allocation4 + $0x140] sm:$0xff]
    %v196 = vld [vmem:[#allocation4 + $0x148] sm:$0xff]
    %v197 = vld [vmem:[#allocation4 + $0x150] sm:$0xff]
    %v198 = vld [vmem:[#allocation4 + $0x158] sm:$0xff]
    %v199 = vld [vmem:[#allocation4 + $0x160] sm:$0xff]
    %v200 = vld [vmem:[#allocation4 + $0x168] sm:$0xff]
    %v201 = vld [vmem:[#allocation4 + $0x170] sm:$0xff]
    %v202 = vld [vmem:[#allocation4 + $0x178] sm:$0xff]
    %v203 = vld [vmem:[#allocation4 + $0x180] sm:$0xff]
    %v204 = vld [vmem:[#allocation4 + $0x188] sm:$0xff]
    %v205 = vld [vmem:[#allocation4 + $0x190] sm:$0xff]
    %v206 = vld [vmem:[#allocation4 + $0x198] sm:$0xff]
    %v207 = vld [vmem:[#allocation4 + $0x1a0] sm:$0xff]
    %v208 = vld [vmem:[#allocation4 + $0x1a8] sm:$0xff]
    %v209 = vld [vmem:[#allocation4 + $0x1b0] sm:$0xff]
    %v210 = vld [vmem:[#allocation4 + $0x1b8] sm:$0xff]
    %v211 = vld [vmem:[#allocation4 + $0x1c0] sm:$0xff]
    %v212 = vld [vmem:[#allocation4 + $0x1c8] sm:$0xff]
    %v213 = vld [vmem:[#allocation4 + $0x1d0] sm:$0xff]
    %v214 = vld [vmem:[#allocation4 + $0x1d8] sm:$0xff]
    %v215 = vld [vmem:[#allocation4 + $0x1e0] sm:$0xff]
    %v216 = vld [vmem:[#allocation4 + $0x1e8] sm:$0xff]
    %v217 = vld [vmem:[#allocation4 + $0x1f0] sm:$0xff]
    %v218 = vld [vmem:[#allocation4 + $0x1f8] sm:$0xff]
    %v219 = vld [vmem:[#allocation4 + $0x200] sm:$0xff]
    %v220 = vld [vmem:[#allocation4 + $0x208] sm:$0xff]
    %v221 = vld [vmem:[#allocation4 + $0x210] sm:$0xff]
    %v222 = vld [vmem:[#allocation4 + $0x218] sm:$0xff]
    %v223 = vld [vmem:[#allocation4 + $0x220] sm:$0xff]
    %v224 = vld [vmem:[#allocation4 + $0x228] sm:$0xff]
    %v225 = vld [vmem:[#allocation4 + $0x230] sm:$0xff]
    %v226 = vld [vmem:[#allocation4 + $0x238] sm:$0xff]
    %v227 = vld [vmem:[#allocation4 + $0x240] sm:$0xff]
    %v228 = vld [vmem:[#allocation4 + $0x248] sm:$0xff]
    %v229 = vld [vmem:[#allocation4 + $0x250] sm:$0xff]
    %v230 = vld [vmem:[#allocation4 + $0x258] sm:$0xff]
    %v231 = vld [vmem:[#allocation4 + $0x260] sm:$0xff]
    %v232 = vld [vmem:[#allocation4 + $0x268] sm:$0xff]
    %v233 = vld [vmem:[#allocation4 + $0x270] sm:$0xff]
    %v234 = vld [vmem:[#allocation4 + $0x278] sm:$0xff]
    %v235 = vld [vmem:[#allocation4 + $0x280] sm:$0xff]
    %v236 = vld [vmem:[#allocation4 + $0x288] sm:$0xff]
    %v237 = vld [vmem:[#allocation4 + $0x290] sm:$0xff]
    %v238 = vld [vmem:[#allocation4 + $0x298] sm:$0xff]
    %v239 = vld [vmem:[#allocation4 + $0x2a0] sm:$0xff]
    %v240 = vld [vmem:[#allocation4 + $0x2a8] sm:$0xff]
    %v241 = vld [vmem:[#allocation4 + $0x2b0] sm:$0xff]
    %v242 = vld [vmem:[#allocation4 + $0x2b8] sm:$0xff]
    %v243 = vld [vmem:[#allocation4 + $0x2c0] sm:$0xff]
    %v244 = vld [vmem:[#allocation4 + $0x2c8] sm:$0xff]
    %v245 = vld [vmem:[#allocation4 + $0x2d0] sm:$0xff]
    %v246 = vld [vmem:[#allocation4 + $0x2d8] sm:$0xff]
    %v247 = vld [vmem:[#allocation4 + $0x2e0] sm:$0xff]
    %v248 = vld [vmem:[#allocation4 + $0x2e8] sm:$0xff]
    %v249 = vld [vmem:[#allocation4 + $0x2f0] sm:$0xff]
    %v250 = vld [vmem:[#allocation4 + $0x2f8] sm:$0xff]
    %v251 = vld [vmem:[#allocation4 + $0x300] sm:$0xff]
    %v252 = vld [vmem:[#allocation4 + $0x308] sm:$0xff]
    %v253 = vld [vmem:[#allocation4 + $0x310] sm:$0xff]
    %v254 = vld [vmem:[#allocation4 + $0x318] sm:$0xff]
    %v255 = vld [vmem:[#allocation4 + $0x320] sm:$0xff]
    %v256 = vld [vmem:[#allocation4 + $0x328] sm:$0xff]
    %v257 = vld [vmem:[#allocation4 + $0x330] sm:$0xff]
    %v258 = vld [vmem:[#allocation4 + $0x338] sm:$0xff]
    %v259 = vld [vmem:[#allocation4 + $0x340] sm:$0xff]
    %v260 = vld [vmem:[#allocation4 + $0x348] sm:$0xff]
    %v261 = vld [vmem:[#allocation4 + $0x350] sm:$0xff]
    %v262 = vld [vmem:[#allocation4 + $0x358] sm:$0xff]
    %v263 = vld [vmem:[#allocation4 + $0x360] sm:$0xff]
    %v264 = vld [vmem:[#allocation4 + $0x368] sm:$0xff]
    %v265 = vld [vmem:[#allocation4 + $0x370] sm:$0xff]
    %v266 = vld [vmem:[#allocation4 + $0x378] sm:$0xff]
    %v267 = vld [vmem:[#allocation4 + $0x380] sm:$0xff]
    %v268 = vld [vmem:[#allocation4 + $0x388] sm:$0xff]
    %v269 = vld [vmem:[#allocation4 + $0x390] sm:$0xff]
    %v270 = vld [vmem:[#allocation4 + $0x398] sm:$0xff]
    %v271 = vld [vmem:[#allocation4 + $0x3a0] sm:$0xff]
    %v272 = vld [vmem:[#allocation4 + $0x3a8] sm:$0xff]
    %v273 = vld [vmem:[#allocation4 + $0x3b0] sm:$0xff]
    %v274 = vld [vmem:[#allocation4 + $0x3b8] sm:$0xff]
    %v275 = vld [vmem:[#allocation4 + $0x3c0] sm:$0xff]
    %v276 = vld [vmem:[#allocation4 + $0x3c8] sm:$0xff]
    %v277 = vld [vmem:[#allocation4 + $0x3d0] sm:$0xff]
    %v278 = vld [vmem:[#allocation4 + $0x3d8] sm:$0xff]
    %v279 = vld [vmem:[#allocation4 + $0x3e0] sm:$0xff]
    %v280 = vld [vmem:[#allocation4 + $0x3e8] sm:$0xff]
    %v281 = vld [vmem:[#allocation4 + $0x3f0] sm:$0xff]
    %v282 = vld [vmem:[#allocation4 + $0x3f8] sm:$0xff]
    %v283 = vld [vmem:[#allocation4 + $0x400] sm:$0xff]
    %v284 = vld [vmem:[#allocation4 + $0x408] sm:$0xff]
    %v285 = vld [vmem:[#allocation4 + $0x410] sm:$0xff]
    %v286 = vld [vmem:[#allocation4 + $0x418] sm:$0xff]
    %v287 = vld [vmem:[#allocation4 + $0x420] sm:$0xff]
    %v288 = vld [vmem:[#allocation4 + $0x428] sm:$0xff]
    %v289 = vld [vmem:[#allocation4 + $0x430] sm:$0xff]
    %v290 = vld [vmem:[#allocation4 + $0x438] sm:$0xff]
    %v291 = vld [vmem:[#allocation4 + $0x440] sm:$0xff]
    %v292 = vld [vmem:[#allocation4 + $0x448] sm:$0xff]
    %v293 = vld [vmem:[#allocation4 + $0x450] sm:$0xff]
    %v294 = vld [vmem:[#allocation4 + $0x458] sm:$0xff]
    %v295 = vld [vmem:[#allocation4 + $0x460] sm:$0xff]
    %v296 = vld [vmem:[#allocation4 + $0x468] sm:$0xff]
    %v297 = vld [vmem:[#allocation4 + $0x470] sm:$0xff]
    %v298 = vld [vmem:[#allocation4 + $0x478] sm:$0xff]
    %v299 = vld [vmem:[#allocation4 + $0x480] sm:$0xff]
    %v300 = vld [vmem:[#allocation4 + $0x488] sm:$0xff]
    %v301 = vld [vmem:[#allocation4 + $0x490] sm:$0xff]
    %v302 = vld [vmem:[#allocation4 + $0x498] sm:$0xff]
    %v303 = vld [vmem:[#allocation4 + $0x4a0] sm:$0xff]
    %v304 = vld [vmem:[#allocation4 + $0x4a8] sm:$0xff]
    %v305 = vld [vmem:[#allocation4 + $0x4b0] sm:$0xff]
    %v306 = vld [vmem:[#allocation4 + $0x4b8] sm:$0xff]
    %v307 = vld [vmem:[#allocation4 + $0x4c0] sm:$0xff]
    %v308 = vld [vmem:[#allocation4 + $0x4c8] sm:$0xff]
    %v309 = vld [vmem:[#allocation4 + $0x4d0] sm:$0xff]
    %v310 = vld [vmem:[#allocation4 + $0x4d8] sm:$0xff]
    %v311 = vld [vmem:[#allocation4 + $0x4e0] sm:$0xff]
    %v312 = vld [vmem:[#allocation4 + $0x4e8] sm:$0xff]
    %v313 = vld [vmem:[#allocation4 + $0x4f0] sm:$0xff]
    %v314 = vld [vmem:[#allocation4 + $0x4f8] sm:$0xff]
    %v315 = vld [vmem:[#allocation4 + $0x500] sm:$0xff]
    %v316 = vld [vmem:[#allocation4 + $0x508] sm:$0xff]
    %v317 = vld [vmem:[#allocation4 + $0x510] sm:$0xff]
    %v318 = vld [vmem:[#allocation4 + $0x518] sm:$0xff]
    %v319 = vld [vmem:[#allocation4 + $0x520] sm:$0xff]
    %v320 = vld [vmem:[#allocation4 + $0x528] sm:$0xff]
    %v321 = vld [vmem:[#allocation4 + $0x530] sm:$0xff]
    %v322 = vld [vmem:[#allocation4 + $0x538] sm:$0xff]
    %v323 = vld [vmem:[#allocation4 + $0x540] sm:$0xff]
    %v324 = vld [vmem:[#allocation4 + $0x548] sm:$0xff]
    %v325 = vld [vmem:[#allocation4 + $0x550] sm:$0xff]
    %v326 = vld [vmem:[#allocation4 + $0x558] sm:$0xff]
    %v327 = vld [vmem:[#allocation4 + $0x560] sm:$0xff]
    %v328 = vld [vmem:[#allocation4 + $0x568] sm:$0xff]
    %v329 = vld [vmem:[#allocation4 + $0x570] sm:$0xff]
    %v330 = vld [vmem:[#allocation4 + $0x578] sm:$0xff]
    %v331 = vld [vmem:[#allocation4 + $0x580] sm:$0xff]
    %v332 = vld [vmem:[#allocation4 + $0x588] sm:$0xff]
    %v333 = vld [vmem:[#allocation4 + $0x590] sm:$0xff]
    %v334 = vld [vmem:[#allocation4 + $0x598] sm:$0xff]
    %v335 = vld [vmem:[#allocation4 + $0x5a0] sm:$0xff]
    %v336 = vld [vmem:[#allocation4 + $0x5a8] sm:$0xff]
    %v337 = vld [vmem:[#allocation4 + $0x5b0] sm:$0xff]
    %v338 = vld [vmem:[#allocation4 + $0x5b8] sm:$0xff]
    %v339 = vld [vmem:[#allocation4 + $0x5c0] sm:$0xff]
    %v340 = vld [vmem:[#allocation4 + $0x5c8] sm:$0xff]
    %v341 = vld [vmem:[#allocation4 + $0x5d0] sm:$0xff]
    %v342 = vld [vmem:[#allocation4 + $0x5d8] sm:$0xff]
    %v343 = vld [vmem:[#allocation4 + $0x5e0] sm:$0xff]
    %v344 = vld [vmem:[#allocation4 + $0x5e8] sm:$0xff]
    %v345 = vld [vmem:[#allocation4 + $0x5f0] sm:$0xff]
    %v346 = vld [vmem:[#allocation4 + $0x5f8] sm:$0xff]
    %v347 = vld [vmem:[#allocation4 + $0x600] sm:$0xff]
    %v348 = vld [vmem:[#allocation4 + $0x608] sm:$0xff]
    %v349 = vld [vmem:[#allocation4 + $0x610] sm:$0xff]
    %v350 = vld [vmem:[#allocation4 + $0x618] sm:$0xff]
    %v351 = vld [vmem:[#allocation6] sm:$0xf]
    %v353 = vlaneseq
    %v354 = vshrl.u32 %v353, 7
    %v355 = vsub.s32 0, %v354
    %v356 = vrot.slane %v351, %v355
    %v357 = vlaneseq
    %v358 = vshrl.u32 %v357, 7
    %v359 = vsub.s32 1, %v358
    %v360 = vrot.slane %v351, %v359
    %v361 = vlaneseq
    %v362 = vshrl.u32 %v361, 7
    %v363 = vsub.s32 2, %v362
    %v364 = vrot.slane %v351, %v363
    %v365 = vlaneseq
    %v366 = vshrl.u32 %v365, 7
    %v367 = vsub.s32 3, %v366
    %v368 = vrot.slane %v351, %v367
    %v569 = vunpack.c.l.b16 %v155
    %v570 = vunpack.c.h.b16 %v155
    %v571 = vunpack.c.l.b16 %v156
    %v572 = vunpack.c.h.b16 %v156
    %v573 = vunpack.c.l.b16 %v157
    %v574 = vunpack.c.h.b16 %v157
    %v575 = vunpack.c.l.b16 %v158
    %v576 = vunpack.c.h.b16 %v158
    %v577 = vunpack.c.l.b16 %v159
    %v578 = vunpack.c.h.b16 %v159
    %v579 = vunpack.c.l.b16 %v160
    %v580 = vunpack.c.h.b16 %v160
    %v581 = vunpack.c.l.b16 %v161
    %v582 = vunpack.c.h.b16 %v161
    %v583 = vunpack.c.l.b16 %v162
    %v584 = vunpack.c.h.b16 %v162
    %v585 = vunpack.c.l.b16 %v163
    %v586 = vunpack.c.h.b16 %v163
    %v587 = vunpack.c.l.b16 %v164
    %v588 = vunpack.c.h.b16 %v164
    %v589 = vunpack.c.l.b16 %v165
    %v590 = vunpack.c.h.b16 %v165
    %v591 = vunpack.c.l.b16 %v166
    %v592 = vunpack.c.h.b16 %v166
    %v593 = vunpack.c.l.b16 %v167
    %v594 = vunpack.c.h.b16 %v167
    %v595 = vunpack.c.l.b16 %v168
    %v596 = vunpack.c.h.b16 %v168
    %v597 = vunpack.c.l.b16 %v169
    %v598 = vunpack.c.h.b16 %v169
    %v599 = vunpack.c.l.b16 %v170
    %v600 = vunpack.c.h.b16 %v170
    %v601 = vunpack.c.l.b16 %v171
    %v602 = vunpack.c.h.b16 %v171
    %v603 = vunpack.c.l.b16 %v172
    %v604 = vunpack.c.h.b16 %v172
    %v605 = vunpack.c.l.b16 %v173
    %v606 = vunpack.c.h.b16 %v173
    %v607 = vunpack.c.l.b16 %v174
    %v608 = vunpack.c.h.b16 %v174
    %v609 = vunpack.c.l.b16 %v175
    %v610 = vunpack.c.h.b16 %v175
    %v611 = vunpack.c.l.b16 %v176
    %v612 = vunpack.c.h.b16 %v176
    %v613 = vunpack.c.l.b16 %v177
    %v614 = vunpack.c.h.b16 %v177
    %v615 = vunpack.c.l.b16 %v178
    %v616 = vunpack.c.h.b16 %v178
    %v617 = vunpack.c.l.b16 %v179
    %v618 = vunpack.c.h.b16 %v179
    %v619 = vunpack.c.l.b16 %v180
    %v620 = vunpack.c.h.b16 %v180
    %v621 = vunpack.c.l.b16 %v181
    %v622 = vunpack.c.h.b16 %v181
    %v623 = vunpack.c.l.b16 %v182
    %v624 = vunpack.c.h.b16 %v182
    %v625 = vunpack.c.l.b16 %v183
    %v626 = vunpack.c.h.b16 %v183
    %v627 = vunpack.c.l.b16 %v184
    %v628 = vunpack.c.h.b16 %v184
    %v629 = vunpack.c.l.b16 %v185
    %v630 = vunpack.c.h.b16 %v185
    %v631 = vunpack.c.l.b16 %v186
    %v632 = vunpack.c.h.b16 %v186
    %v633 = vunpack.c.l.b16 %v187
    %v634 = vunpack.c.h.b16 %v187
    %v635 = vunpack.c.l.b16 %v188
    %v636 = vunpack.c.h.b16 %v188
    %v637 = vunpack.c.l.b16 %v189
    %v638 = vunpack.c.h.b16 %v189
    %v639 = vunpack.c.l.b16 %v190
    %v640 = vunpack.c.h.b16 %v190
    %v641 = vunpack.c.l.b16 %v191
    %v642 = vunpack.c.h.b16 %v191
    %v643 = vunpack.c.l.b16 %v192
    %v644 = vunpack.c.h.b16 %v192
    %v645 = vunpack.c.l.b16 %v193
    %v646 = vunpack.c.h.b16 %v193
    %v647 = vunpack.c.l.b16 %v194
    %v648 = vunpack.c.h.b16 %v194
    %v649 = vunpack.c.l.b16 %v195
    %v650 = vunpack.c.h.b16 %v195
    %v651 = vunpack.c.l.b16 %v196
    %v652 = vunpack.c.h.b16 %v196
    %v653 = vunpack.c.l.b16 %v197
    %v654 = vunpack.c.h.b16 %v197
    %v655 = vunpack.c.l.b16 %v198
    %v656 = vunpack.c.h.b16 %v198
    %v657 = vunpack.c.l.b16 %v199
    %v658 = vunpack.c.h.b16 %v199
    %v659 = vunpack.c.l.b16 %v200
    %v660 = vunpack.c.h.b16 %v200
    %v661 = vunpack.c.l.b16 %v201
    %v662 = vunpack.c.h.b16 %v201
    %v663 = vunpack.c.l.b16 %v202
    %v664 = vunpack.c.h.b16 %v202
    %v665 = vunpack.c.l.b16 %v203
    %v666 = vunpack.c.h.b16 %v203
    %v667 = vunpack.c.l.b16 %v204
    %v668 = vunpack.c.h.b16 %v204
    %v669 = vunpack.c.l.b16 %v205
    %v670 = vunpack.c.h.b16 %v205
    %v671 = vunpack.c.l.b16 %v206
    %v672 = vunpack.c.h.b16 %v206
    %v673 = vunpack.c.l.b16 %v207
    %v674 = vunpack.c.h.b16 %v207
    %v675 = vunpack.c.l.b16 %v208
    %v676 = vunpack.c.h.b16 %v208
    %v677 = vunpack.c.l.b16 %v209
    %v678 = vunpack.c.h.b16 %v209
    %v679 = vunpack.c.l.b16 %v210
    %v680 = vunpack.c.h.b16 %v210
    %v681 = vunpack.c.l.b16 %v211
    %v682 = vunpack.c.h.b16 %v211
    %v683 = vunpack.c.l.b16 %v212
    %v684 = vunpack.c.h.b16 %v212
    %v685 = vunpack.c.l.b16 %v213
    %v686 = vunpack.c.h.b16 %v213
    %v687 = vunpack.c.l.b16 %v214
    %v688 = vunpack.c.h.b16 %v214
    %v689 = vunpack.c.l.b16 %v215
    %v690 = vunpack.c.h.b16 %v215
    %v691 = vunpack.c.l.b16 %v216
    %v692 = vunpack.c.h.b16 %v216
    %v693 = vunpack.c.l.b16 %v217
    %v694 = vunpack.c.h.b16 %v217
    %v695 = vunpack.c.l.b16 %v218
    %v696 = vunpack.c.h.b16 %v218
    %v697 = vunpack.c.l.b16 %v219
    %v698 = vunpack.c.h.b16 %v219
    %v699 = vunpack.c.l.b16 %v220
    %v700 = vunpack.c.h.b16 %v220
    %v701 = vunpack.c.l.b16 %v221
    %v702 = vunpack.c.h.b16 %v221
    %v703 = vunpack.c.l.b16 %v222
    %v704 = vunpack.c.h.b16 %v222
    %v705 = vunpack.c.l.b16 %v223
    %v706 = vunpack.c.h.b16 %v223
    %v707 = vunpack.c.l.b16 %v224
    %v708 = vunpack.c.h.b16 %v224
    %v709 = vunpack.c.l.b16 %v225
    %v710 = vunpack.c.h.b16 %v225
    %v711 = vunpack.c.l.b16 %v226
    %v712 = vunpack.c.h.b16 %v226
    %v713 = vunpack.c.l.b16 %v227
    %v714 = vunpack.c.h.b16 %v227
    %v715 = vunpack.c.l.b16 %v228
    %v716 = vunpack.c.h.b16 %v228
    %v717 = vunpack.c.l.b16 %v229
    %v718 = vunpack.c.h.b16 %v229
    %v719 = vunpack.c.l.b16 %v230
    %v720 = vunpack.c.h.b16 %v230
    %v721 = vunpack.c.l.b16 %v231
    %v722 = vunpack.c.h.b16 %v231
    %v723 = vunpack.c.l.b16 %v232
    %v724 = vunpack.c.h.b16 %v232
    %v725 = vunpack.c.l.b16 %v233
    %v726 = vunpack.c.h.b16 %v233
    %v727 = vunpack.c.l.b16 %v234
    %v728 = vunpack.c.h.b16 %v234
    %v729 = vunpack.c.l.b16 %v235
    %v730 = vunpack.c.h.b16 %v235
    %v731 = vunpack.c.l.b16 %v236
    %v732 = vunpack.c.h.b16 %v236
    %v733 = vunpack.c.l.b16 %v237
    %v734 = vunpack.c.h.b16 %v237
    %v735 = vunpack.c.l.b16 %v238
    %v736 = vunpack.c.h.b16 %v238
    %v737 = vunpack.c.l.b16 %v239
    %v738 = vunpack.c.h.b16 %v239
    %v739 = vunpack.c.l.b16 %v240
    %v740 = vunpack.c.h.b16 %v240
    %v741 = vunpack.c.l.b16 %v241
    %v742 = vunpack.c.h.b16 %v241
    %v743 = vunpack.c.l.b16 %v242
    %v744 = vunpack.c.h.b16 %v242
    %v745 = vunpack.c.l.b16 %v243
    %v746 = vunpack.c.h.b16 %v243
    %v747 = vunpack.c.l.b16 %v244
    %v748 = vunpack.c.h.b16 %v244
    %v749 = vunpack.c.l.b16 %v245
    %v750 = vunpack.c.h.b16 %v245
    %v751 = vunpack.c.l.b16 %v246
    %v752 = vunpack.c.h.b16 %v246
    %v753 = vunpack.c.l.b16 %v247
    %v754 = vunpack.c.h.b16 %v247
    %v755 = vunpack.c.l.b16 %v248
    %v756 = vunpack.c.h.b16 %v248
    %v757 = vunpack.c.l.b16 %v249
    %v758 = vunpack.c.h.b16 %v249
    %v759 = vunpack.c.l.b16 %v250
    %v760 = vunpack.c.h.b16 %v250
    %v761 = vunpack.c.l.b16 %v251
    %v762 = vunpack.c.h.b16 %v251
    %v763 = vunpack.c.l.b16 %v252
    %v764 = vunpack.c.h.b16 %v252
    %v765 = vunpack.c.l.b16 %v253
    %v766 = vunpack.c.h.b16 %v253
    %v767 = vunpack.c.l.b16 %v254
    %v768 = vunpack.c.h.b16 %v254
    %v769 = vunpack.c.l.b16 %v255
    %v770 = vunpack.c.h.b16 %v255
    %v771 = vunpack.c.l.b16 %v256
    %v772 = vunpack.c.h.b16 %v256
    %v773 = vunpack.c.l.b16 %v257
    %v774 = vunpack.c.h.b16 %v257
    %v775 = vunpack.c.l.b16 %v258
    %v776 = vunpack.c.h.b16 %v258
    %v777 = vunpack.c.l.b16 %v259
    %v778 = vunpack.c.h.b16 %v259
    %v779 = vunpack.c.l.b16 %v260
    %v780 = vunpack.c.h.b16 %v260
    %v781 = vunpack.c.l.b16 %v261
    %v782 = vunpack.c.h.b16 %v261
    %v783 = vunpack.c.l.b16 %v262
    %v784 = vunpack.c.h.b16 %v262
    %v785 = vunpack.c.l.b16 %v263
    %v786 = vunpack.c.h.b16 %v263
    %v787 = vunpack.c.l.b16 %v264
    %v788 = vunpack.c.h.b16 %v264
    %v789 = vunpack.c.l.b16 %v265
    %v790 = vunpack.c.h.b16 %v265
    %v791 = vunpack.c.l.b16 %v266
    %v792 = vunpack.c.h.b16 %v266
    %v793 = vunpack.c.l.b16 %v267
    %v794 = vunpack.c.h.b16 %v267
    %v795 = vunpack.c.l.b16 %v268
    %v796 = vunpack.c.h.b16 %v268
    %v797 = vunpack.c.l.b16 %v269
    %v798 = vunpack.c.h.b16 %v269
    %v799 = vunpack.c.l.b16 %v270
    %v800 = vunpack.c.h.b16 %v270
    %v801 = vunpack.c.l.b16 %v271
    %v802 = vunpack.c.h.b16 %v271
    %v803 = vunpack.c.l.b16 %v272
    %v804 = vunpack.c.h.b16 %v272
    %v805 = vunpack.c.l.b16 %v273
    %v806 = vunpack.c.h.b16 %v273
    %v807 = vunpack.c.l.b16 %v274
    %v808 = vunpack.c.h.b16 %v274
    %v809 = vunpack.c.l.b16 %v275
    %v810 = vunpack.c.h.b16 %v275
    %v811 = vunpack.c.l.b16 %v276
    %v812 = vunpack.c.h.b16 %v276
    %v813 = vunpack.c.l.b16 %v277
    %v814 = vunpack.c.h.b16 %v277
    %v815 = vunpack.c.l.b16 %v278
    %v816 = vunpack.c.h.b16 %v278
    %v817 = vunpack.c.l.b16 %v279
    %v818 = vunpack.c.h.b16 %v279
    %v819 = vunpack.c.l.b16 %v280
    %v820 = vunpack.c.h.b16 %v280
    %v821 = vunpack.c.l.b16 %v281
    %v822 = vunpack.c.h.b16 %v281
    %v823 = vunpack.c.l.b16 %v282
    %v824 = vunpack.c.h.b16 %v282
    %v825 = vunpack.c.l.b16 %v283
    %v826 = vunpack.c.h.b16 %v283
    %v827 = vunpack.c.l.b16 %v284
    %v828 = vunpack.c.h.b16 %v284
    %v829 = vunpack.c.l.b16 %v285
    %v830 = vunpack.c.h.b16 %v285
    %v831 = vunpack.c.l.b16 %v286
    %v832 = vunpack.c.h.b16 %v286
    %v833 = vunpack.c.l.b16 %v287
    %v834 = vunpack.c.h.b16 %v287
    %v835 = vunpack.c.l.b16 %v288
    %v836 = vunpack.c.h.b16 %v288
    %v837 = vunpack.c.l.b16 %v289
    %v838 = vunpack.c.h.b16 %v289
    %v839 = vunpack.c.l.b16 %v290
    %v840 = vunpack.c.h.b16 %v290
    %v841 = vunpack.c.l.b16 %v291
    %v842 = vunpack.c.h.b16 %v291
    %v843 = vunpack.c.l.b16 %v292
    %v844 = vunpack.c.h.b16 %v292
    %v845 = vunpack.c.l.b16 %v293
    %v846 = vunpack.c.h.b16 %v293
    %v847 = vunpack.c.l.b16 %v294
    %v848 = vunpack.c.h.b16 %v294
    %v849 = vunpack.c.l.b16 %v295
    %v850 = vunpack.c.h.b16 %v295
    %v851 = vunpack.c.l.b16 %v296
    %v852 = vunpack.c.h.b16 %v296
    %v853 = vunpack.c.l.b16 %v297
    %v854 = vunpack.c.h.b16 %v297
    %v855 = vunpack.c.l.b16 %v298
    %v856 = vunpack.c.h.b16 %v298
    %v857 = vunpack.c.l.b16 %v299
    %v858 = vunpack.c.h.b16 %v299
    %v859 = vunpack.c.l.b16 %v300
    %v860 = vunpack.c.h.b16 %v300
    %v861 = vunpack.c.l.b16 %v301
    %v862 = vunpack.c.h.b16 %v301
    %v863 = vunpack.c.l.b16 %v302
    %v864 = vunpack.c.h.b16 %v302
    %v865 = vunpack.c.l.b16 %v303
    %v866 = vunpack.c.h.b16 %v303
    %v867 = vunpack.c.l.b16 %v304
    %v868 = vunpack.c.h.b16 %v304
    %v869 = vunpack.c.l.b16 %v305
    %v870 = vunpack.c.h.b16 %v305
    %v871 = vunpack.c.l.b16 %v306
    %v872 = vunpack.c.h.b16 %v306
    %v873 = vunpack.c.l.b16 %v307
    %v874 = vunpack.c.h.b16 %v307
    %v875 = vunpack.c.l.b16 %v308
    %v876 = vunpack.c.h.b16 %v308
    %v877 = vunpack.c.l.b16 %v309
    %v878 = vunpack.c.h.b16 %v309
    %v879 = vunpack.c.l.b16 %v310
    %v880 = vunpack.c.h.b16 %v310
    %v881 = vunpack.c.l.b16 %v311
    %v882 = vunpack.c.h.b16 %v311
    %v883 = vunpack.c.l.b16 %v312
    %v884 = vunpack.c.h.b16 %v312
    %v885 = vunpack.c.l.b16 %v313
    %v886 = vunpack.c.h.b16 %v313
    %v887 = vunpack.c.l.b16 %v314
    %v888 = vunpack.c.h.b16 %v314
    %v889 = vunpack.c.l.b16 %v315
    %v890 = vunpack.c.h.b16 %v315
    %v891 = vunpack.c.l.b16 %v316
    %v892 = vunpack.c.h.b16 %v316
    %v893 = vunpack.c.l.b16 %v317
    %v894 = vunpack.c.h.b16 %v317
    %v895 = vunpack.c.l.b16 %v318
    %v896 = vunpack.c.h.b16 %v318
    %v897 = vunpack.c.l.b16 %v319
    %v898 = vunpack.c.h.b16 %v319
    %v899 = vunpack.c.l.b16 %v320
    %v900 = vunpack.c.h.b16 %v320
    %v901 = vunpack.c.l.b16 %v321
    %v902 = vunpack.c.h.b16 %v321
    %v903 = vunpack.c.l.b16 %v322
    %v904 = vunpack.c.h.b16 %v322
    %v905 = vunpack.c.l.b16 %v323
    %v906 = vunpack.c.h.b16 %v323
    %v907 = vunpack.c.l.b16 %v324
    %v908 = vunpack.c.h.b16 %v324
    %v909 = vunpack.c.l.b16 %v325
    %v910 = vunpack.c.h.b16 %v325
    %v911 = vunpack.c.l.b16 %v326
    %v912 = vunpack.c.h.b16 %v326
    %v913 = vunpack.c.l.b16 %v327
    %v914 = vunpack.c.h.b16 %v327
    %v915 = vunpack.c.l.b16 %v328
    %v916 = vunpack.c.h.b16 %v328
    %v917 = vunpack.c.l.b16 %v329
    %v918 = vunpack.c.h.b16 %v329
    %v919 = vunpack.c.l.b16 %v330
    %v920 = vunpack.c.h.b16 %v330
    %v921 = vunpack.c.l.b16 %v331
    %v922 = vunpack.c.h.b16 %v331
    %v923 = vunpack.c.l.b16 %v332
    %v924 = vunpack.c.h.b16 %v332
    %v925 = vunpack.c.l.b16 %v333
    %v926 = vunpack.c.h.b16 %v333
    %v927 = vunpack.c.l.b16 %v334
    %v928 = vunpack.c.h.b16 %v334
    %v929 = vunpack.c.l.b16 %v335
    %v930 = vunpack.c.h.b16 %v335
    %v931 = vunpack.c.l.b16 %v336
    %v932 = vunpack.c.h.b16 %v336
    %v933 = vunpack.c.l.b16 %v337
    %v934 = vunpack.c.h.b16 %v337
    %v935 = vunpack.c.l.b16 %v338
    %v936 = vunpack.c.h.b16 %v338
    %v937 = vunpack.c.l.b16 %v339
    %v938 = vunpack.c.h.b16 %v339
    %v939 = vunpack.c.l.b16 %v340
    %v940 = vunpack.c.h.b16 %v340
    %v941 = vunpack.c.l.b16 %v341
    %v942 = vunpack.c.h.b16 %v341
    %v943 = vunpack.c.l.b16 %v342
    %v944 = vunpack.c.h.b16 %v342
    %v945 = vunpack.c.l.b16 %v343
    %v946 = vunpack.c.h.b16 %v343
    %v947 = vunpack.c.l.b16 %v344
    %v948 = vunpack.c.h.b16 %v344
    %v949 = vunpack.c.l.b16 %v345
    %v950 = vunpack.c.h.b16 %v345
    %v951 = vunpack.c.l.b16 %v346
    %v952 = vunpack.c.h.b16 %v346
    %v953 = vunpack.c.l.b16 %v347
    %v954 = vunpack.c.h.b16 %v347
    %v955 = vunpack.c.l.b16 %v348
    %v956 = vunpack.c.h.b16 %v348
    %v957 = vunpack.c.l.b16 %v349
    %v958 = vunpack.c.h.b16 %v349
    %v959 = vunpack.c.l.b16 %v350
    %v960 = vunpack.c.h.b16 %v350
    %v961 = vpack.c.b16 %v573, %v569
    %v962 = vpack.c.b16 %v574, %v570
    %v963 = vpack.c.b16 %v575, %v571
    %v964 = vpack.c.b16 %v576, %v572
    %v965 = vpack.c.b16 %v581, %v577
    %v966 = vpack.c.b16 %v582, %v578
    %v967 = vpack.c.b16 %v583, %v579
    %v968 = vpack.c.b16 %v584, %v580
    %v969 = vpack.c.b16 %v589, %v585
    %v970 = vpack.c.b16 %v590, %v586
    %v971 = vpack.c.b16 %v591, %v587
    %v972 = vpack.c.b16 %v592, %v588
    %v973 = vpack.c.b16 %v597, %v593
    %v974 = vpack.c.b16 %v598, %v594
    %v975 = vpack.c.b16 %v599, %v595
    %v976 = vpack.c.b16 %v600, %v596
    %v977 = vpack.c.b16 %v605, %v601
    %v978 = vpack.c.b16 %v606, %v602
    %v979 = vpack.c.b16 %v607, %v603
    %v980 = vpack.c.b16 %v608, %v604
    %v981 = vpack.c.b16 %v613, %v609
    %v982 = vpack.c.b16 %v614, %v610
    %v983 = vpack.c.b16 %v615, %v611
    %v984 = vpack.c.b16 %v616, %v612
    %v985 = vpack.c.b16 %v621, %v617
    %v986 = vpack.c.b16 %v622, %v618
    %v987 = vpack.c.b16 %v623, %v619
    %v988 = vpack.c.b16 %v624, %v620
    %v989 = vpack.c.b16 %v629, %v625
    %v990 = vpack.c.b16 %v630, %v626
    %v991 = vpack.c.b16 %v631, %v627
    %v992 = vpack.c.b16 %v632, %v628
    %v993 = vpack.c.b16 %v637, %v633
    %v994 = vpack.c.b16 %v638, %v634
    %v995 = vpack.c.b16 %v639, %v635
    %v996 = vpack.c.b16 %v640, %v636
    %v997 = vpack.c.b16 %v645, %v641
    %v998 = vpack.c.b16 %v646, %v642
    %v999 = vpack.c.b16 %v647, %v643
    %v1000 = vpack.c.b16 %v648, %v644
    %v1001 = vpack.c.b16 %v653, %v649
    %v1002 = vpack.c.b16 %v654, %v650
    %v1003 = vpack.c.b16 %v655, %v651
    %v1004 = vpack.c.b16 %v656, %v652
    %v1005 = vpack.c.b16 %v661, %v657
    %v1006 = vpack.c.b16 %v662, %v658
    %v1007 = vpack.c.b16 %v663, %v659
    %v1008 = vpack.c.b16 %v664, %v660
    %v1009 = vpack.c.b16 %v669, %v665
    %v1010 = vpack.c.b16 %v670, %v666
    %v1011 = vpack.c.b16 %v671, %v667
    %v1012 = vpack.c.b16 %v672, %v668
    %v1013 = vpack.c.b16 %v677, %v673
    %v1014 = vpack.c.b16 %v678, %v674
    %v1015 = vpack.c.b16 %v679, %v675
    %v1016 = vpack.c.b16 %v680, %v676
    %v1017 = vpack.c.b16 %v685, %v681
    %v1018 = vpack.c.b16 %v686, %v682
    %v1019 = vpack.c.b16 %v687, %v683
    %v1020 = vpack.c.b16 %v688, %v684
    %v1021 = vpack.c.b16 %v693, %v689
    %v1022 = vpack.c.b16 %v694, %v690
    %v1023 = vpack.c.b16 %v695, %v691
    %v1024 = vpack.c.b16 %v696, %v692
    %v1025 = vpack.c.b16 %v701, %v697
    %v1026 = vpack.c.b16 %v702, %v698
    %v1027 = vpack.c.b16 %v703, %v699
    %v1028 = vpack.c.b16 %v704, %v700
    %v1029 = vpack.c.b16 %v709, %v705
    %v1030 = vpack.c.b16 %v710, %v706
    %v1031 = vpack.c.b16 %v711, %v707
    %v1032 = vpack.c.b16 %v712, %v708
    %v1033 = vpack.c.b16 %v717, %v713
    %v1034 = vpack.c.b16 %v718, %v714
    %v1035 = vpack.c.b16 %v719, %v715
    %v1036 = vpack.c.b16 %v720, %v716
    %v1037 = vpack.c.b16 %v725, %v721
    %v1038 = vpack.c.b16 %v726, %v722
    %v1039 = vpack.c.b16 %v727, %v723
    %v1040 = vpack.c.b16 %v728, %v724
    %v1041 = vpack.c.b16 %v733, %v729
    %v1042 = vpack.c.b16 %v734, %v730
    %v1043 = vpack.c.b16 %v735, %v731
    %v1044 = vpack.c.b16 %v736, %v732
    %v1045 = vpack.c.b16 %v741, %v737
    %v1046 = vpack.c.b16 %v742, %v738
    %v1047 = vpack.c.b16 %v743, %v739
    %v1048 = vpack.c.b16 %v744, %v740
    %v1049 = vpack.c.b16 %v749, %v745
    %v1050 = vpack.c.b16 %v750, %v746
    %v1051 = vpack.c.b16 %v751, %v747
    %v1052 = vpack.c.b16 %v752, %v748
    %v1053 = vpack.c.b16 %v757, %v753
    %v1054 = vpack.c.b16 %v758, %v754
    %v1055 = vpack.c.b16 %v759, %v755
    %v1056 = vpack.c.b16 %v760, %v756
    %v1057 = vpack.c.b16 %v765, %v761
    %v1058 = vpack.c.b16 %v766, %v762
    %v1059 = vpack.c.b16 %v767, %v763
    %v1060 = vpack.c.b16 %v768, %v764
    %v1061 = vpack.c.b16 %v773, %v769
    %v1062 = vpack.c.b16 %v774, %v770
    %v1063 = vpack.c.b16 %v775, %v771
    %v1064 = vpack.c.b16 %v776, %v772
    %v1065 = vpack.c.b16 %v781, %v777
    %v1066 = vpack.c.b16 %v782, %v778
    %v1067 = vpack.c.b16 %v783, %v779
    %v1068 = vpack.c.b16 %v784, %v780
    %v1069 = vpack.c.b16 %v789, %v785
    %v1070 = vpack.c.b16 %v790, %v786
    %v1071 = vpack.c.b16 %v791, %v787
    %v1072 = vpack.c.b16 %v792, %v788
    %v1073 = vpack.c.b16 %v797, %v793
    %v1074 = vpack.c.b16 %v798, %v794
    %v1075 = vpack.c.b16 %v799, %v795
    %v1076 = vpack.c.b16 %v800, %v796
    %v1077 = vpack.c.b16 %v805, %v801
    %v1078 = vpack.c.b16 %v806, %v802
    %v1079 = vpack.c.b16 %v807, %v803
    %v1080 = vpack.c.b16 %v808, %v804
    %v1081 = vpack.c.b16 %v813, %v809
    %v1082 = vpack.c.b16 %v814, %v810
    %v1083 = vpack.c.b16 %v815, %v811
    %v1084 = vpack.c.b16 %v816, %v812
    %v1085 = vpack.c.b16 %v821, %v817
    %v1086 = vpack.c.b16 %v822, %v818
    %v1087 = vpack.c.b16 %v823, %v819
    %v1088 = vpack.c.b16 %v824, %v820
    %v1089 = vpack.c.b16 %v829, %v825
    %v1090 = vpack.c.b16 %v830, %v826
    %v1091 = vpack.c.b16 %v831, %v827
    %v1092 = vpack.c.b16 %v832, %v828
    %v1093 = vpack.c.b16 %v837, %v833
    %v1094 = vpack.c.b16 %v838, %v834
    %v1095 = vpack.c.b16 %v839, %v835
    %v1096 = vpack.c.b16 %v840, %v836
    %v1097 = vpack.c.b16 %v845, %v841
    %v1098 = vpack.c.b16 %v846, %v842
    %v1099 = vpack.c.b16 %v847, %v843
    %v1100 = vpack.c.b16 %v848, %v844
    %v1101 = vpack.c.b16 %v853, %v849
    %v1102 = vpack.c.b16 %v854, %v850
    %v1103 = vpack.c.b16 %v855, %v851
    %v1104 = vpack.c.b16 %v856, %v852
    %v1105 = vpack.c.b16 %v861, %v857
    %v1106 = vpack.c.b16 %v862, %v858
    %v1107 = vpack.c.b16 %v863, %v859
    %v1108 = vpack.c.b16 %v864, %v860
    %v1109 = vpack.c.b16 %v869, %v865
    %v1110 = vpack.c.b16 %v870, %v866
    %v1111 = vpack.c.b16 %v871, %v867
    %v1112 = vpack.c.b16 %v872, %v868
    %v1113 = vpack.c.b16 %v877, %v873
    %v1114 = vpack.c.b16 %v878, %v874
    %v1115 = vpack.c.b16 %v879, %v875
    %v1116 = vpack.c.b16 %v880, %v876
    %v1117 = vpack.c.b16 %v885, %v881
    %v1118 = vpack.c.b16 %v886, %v882
    %v1119 = vpack.c.b16 %v887, %v883
    %v1120 = vpack.c.b16 %v888, %v884
    %v1121 = vpack.c.b16 %v893, %v889
    %v1122 = vpack.c.b16 %v894, %v890
    %v1123 = vpack.c.b16 %v895, %v891
    %v1124 = vpack.c.b16 %v896, %v892
    %v1125 = vpack.c.b16 %v901, %v897
    %v1126 = vpack.c.b16 %v902, %v898
    %v1127 = vpack.c.b16 %v903, %v899
    %v1128 = vpack.c.b16 %v904, %v900
    %v1129 = vpack.c.b16 %v909, %v905
    %v1130 = vpack.c.b16 %v910, %v906
    %v1131 = vpack.c.b16 %v911, %v907
    %v1132 = vpack.c.b16 %v912, %v908
    %v1133 = vpack.c.b16 %v917, %v913
    %v1134 = vpack.c.b16 %v918, %v914
    %v1135 = vpack.c.b16 %v919, %v915
    %v1136 = vpack.c.b16 %v920, %v916
    %v1137 = vpack.c.b16 %v925, %v921
    %v1138 = vpack.c.b16 %v926, %v922
    %v1139 = vpack.c.b16 %v927, %v923
    %v1140 = vpack.c.b16 %v928, %v924
    %v1141 = vpack.c.b16 %v933, %v929
    %v1142 = vpack.c.b16 %v934, %v930
    %v1143 = vpack.c.b16 %v935, %v931
    %v1144 = vpack.c.b16 %v936, %v932
    %v1145 = vpack.c.b16 %v941, %v937
    %v1146 = vpack.c.b16 %v942, %v938
    %v1147 = vpack.c.b16 %v943, %v939
    %v1148 = vpack.c.b16 %v944, %v940
    %v1149 = vpack.c.b16 %v949, %v945
    %v1150 = vpack.c.b16 %v950, %v946
    %v1151 = vpack.c.b16 %v951, %v947
    %v1152 = vpack.c.b16 %v952, %v948
    %v1153 = vpack.c.b16 %v957, %v953
    %v1154 = vpack.c.b16 %v958, %v954
    %v1155 = vpack.c.b16 %v959, %v955
    %v1156 = vpack.c.b16 %v960, %v956
    %vm1353 = vcmask 130048
    %v1355 = vsel %vm1353, %v147, 0
    %v1358 = vsel %vm1353, %v154, 0
    %1360 = vmatprep.subr.bf16.mxu0 %v990
    %1361 = vmatpush1.bf16.msra.mxu0 %v989
    %1362 = vmatprep.subr.bf16.mxu0 %v986
    %1363 = vmatpush1.bf16.msra.mxu0 %v985
    %1364 = vmatprep.subr.bf16.mxu0 %v982
    %1365 = vmatpush1.bf16.msra.mxu0 %v981
    %1366 = vmatprep.subr.bf16.mxu0 %v978
    %1367 = vmatpush1.bf16.msra.mxu0 %v977
    %1368 = vmatprep.subr.bf16.mxu0 %v974
    %1369 = vmatpush1.bf16.msra.mxu0 %v973
    %1370 = vmatprep.subr.bf16.mxu0 %v970
    %1371 = vmatpush1.bf16.msra.mxu0 %v969
    %1372 = vmatprep.subr.bf16.mxu0 %v966
    %1373 = vmatpush1.bf16.msra.mxu0 %v965
    %1374 = vmatprep.subr.bf16.mxu0 %v962
    %1375 = vmatpush1.bf16.msra.mxu0 %v961
    %1376 = vmatprep.subr.bf16.mxu0 %v1022
    %1377 = vmatpush2.bf16.msra.mxu0 %v1021
    %1378 = vmatprep.subr.bf16.mxu0 %v1018
    %1379 = vmatpush2.bf16.msra.mxu0 %v1017
    %1380 = vmatprep.subr.bf16.mxu0 %v1014
    %1381 = vmatpush2.bf16.msra.mxu0 %v1013
    %1382 = vmatprep.subr.bf16.mxu0 %v1010
    %1383 = vmatpush2.bf16.msra.mxu0 %v1009
    %1384 = vmatprep.subr.bf16.mxu0 %v1006
    %1385 = vmatpush2.bf16.msra.mxu0 %v1005
    %1386 = vmatprep.subr.bf16.mxu0 %v1002
    %1387 = vmatpush2.bf16.msra.mxu0 %v1001
    %1388 = vmatprep.subr.bf16.mxu0 %v998
    %1389 = vmatpush2.bf16.msra.mxu0 %v997
    %1390 = vmatprep.subr.bf16.mxu0 %v994
    %1391 = vmatpush2.bf16.msra.mxu0 %v993
    %1392 = vmatprep.mubr.bf16.mxu0 %v142
    %1393 = vmatmul.mubr.bf16.gmra.mxu0 %v141
    %v1394 = vpop.f32.mrf.mxu0
    %v1395 = vadd.f32 %v356, %v1394
    %v1396 = vpop.f32.mrf.mxu0
    %v1397 = vadd.f32 %v360, %v1396
    %v1398 = vpop.f32.mrf.mxu0
    %v1399 = vadd.f32 %v356, %v1398
    %v1400 = vpop.f32.mrf.mxu0
    %v1401 = vadd.f32 %v360, %v1400
    %1402 = vmatprep.mubr.bf16.mxu0 %v149
    %1403 = vmatmul.mubr.bf16.gmra.mxu0 %v148
    %v1404 = vpop.f32.mrf.mxu0
    %v1405 = vadd.f32 %v356, %v1404
    %v1406 = vpop.f32.mrf.mxu0
    %v1407 = vadd.f32 %v360, %v1406
    %v1408 = vpop.f32.mrf.mxu0
    %v1409 = vadd.f32 %v356, %v1408
    %v1410 = vpop.f32.mrf.mxu0
    %v1411 = vadd.f32 %v360, %v1410
    %1412 = vdwg.mxu0
    %1413 = vmatprep.subr.bf16.mxu0 %v1054
    %1414 = vmatpush1.bf16.msra.mxu0 %v1053
    %1415 = vmatprep.subr.bf16.mxu0 %v1050
    %1416 = vmatpush1.bf16.msra.mxu0 %v1049
    %1417 = vmatprep.subr.bf16.mxu0 %v1046
    %1418 = vmatpush1.bf16.msra.mxu0 %v1045
    %1419 = vmatprep.subr.bf16.mxu0 %v1042
    %1420 = vmatpush1.bf16.msra.mxu0 %v1041
    %1421 = vmatprep.subr.bf16.mxu0 %v1038
    %1422 = vmatpush1.bf16.msra.mxu0 %v1037
    %1423 = vmatprep.subr.bf16.mxu0 %v1034
    %1424 = vmatpush1.bf16.msra.mxu0 %v1033
    %1425 = vmatprep.subr.bf16.mxu0 %v1030
    %1426 = vmatpush1.bf16.msra.mxu0 %v1029
    %1427 = vmatprep.subr.bf16.mxu0 %v1026
    %1428 = vmatpush1.bf16.msra.mxu0 %v1025
    %1429 = vmatprep.subr.bf16.mxu0 %v1086
    %1430 = vmatpush2.bf16.msra.mxu0 %v1085
    %1431 = vmatprep.subr.bf16.mxu0 %v1082
    %1432 = vmatpush2.bf16.msra.mxu0 %v1081
    %1433 = vmatprep.subr.bf16.mxu0 %v1078
    %1434 = vmatpush2.bf16.msra.mxu0 %v1077
    %1435 = vmatprep.subr.bf16.mxu0 %v1074
    %1436 = vmatpush2.bf16.msra.mxu0 %v1073
    %1437 = vmatprep.subr.bf16.mxu0 %v1070
    %1438 = vmatpush2.bf16.msra.mxu0 %v1069
    %1439 = vmatprep.subr.bf16.mxu0 %v1066
    %1440 = vmatpush2.bf16.msra.mxu0 %v1065
    %1441 = vmatprep.subr.bf16.mxu0 %v1062
    %1442 = vmatpush2.bf16.msra.mxu0 %v1061
    %1443 = vmatprep.subr.bf16.mxu0 %v1058
    %1444 = vmatpush2.bf16.msra.mxu0 %v1057
    %1445 = vmatprep.mubr.bf16.mxu0 %v144
    %1446 = vmatmul.mubr.bf16.gmra.mxu0 %v143
    %v1447 = vpop.f32.mrf.mxu0
    %v1448 = vadd.f32 %v1395, %v1447
    %v1449 = vpop.f32.mrf.mxu0
    %v1450 = vadd.f32 %v1397, %v1449
    %v1451 = vpop.f32.mrf.mxu0
    %v1452 = vadd.f32 %v1399, %v1451
    %v1453 = vpop.f32.mrf.mxu0
    %v1454 = vadd.f32 %v1401, %v1453
    %1455 = vmatprep.mubr.bf16.mxu0 %v151
    %1456 = vmatmul.mubr.bf16.gmra.mxu0 %v150
    %v1457 = vpop.f32.mrf.mxu0
    %v1458 = vadd.f32 %v1405, %v1457
    %v1459 = vpop.f32.mrf.mxu0
    %v1460 = vadd.f32 %v1407, %v1459
    %v1461 = vpop.f32.mrf.mxu0
    %v1462 = vadd.f32 %v1409, %v1461
    %v1463 = vpop.f32.mrf.mxu0
    %v1464 = vadd.f32 %v1411, %v1463
    %1465 = vdwg.mxu0
    %1466 = vmatprep.subr.bf16.mxu0 %v1118
    %1467 = vmatpush1.bf16.msra.mxu0 %v1117
    %1468 = vmatprep.subr.bf16.mxu0 %v1114
    %1469 = vmatpush1.bf16.msra.mxu0 %v1113
    %1470 = vmatprep.subr.bf16.mxu0 %v1110
    %1471 = vmatpush1.bf16.msra.mxu0 %v1109
    %1472 = vmatprep.subr.bf16.mxu0 %v1106
    %1473 = vmatpush1.bf16.msra.mxu0 %v1105
    %1474 = vmatprep.subr.bf16.mxu0 %v1102
    %1475 = vmatpush1.bf16.msra.mxu0 %v1101
    %1476 = vmatprep.subr.bf16.mxu0 %v1098
    %1477 = vmatpush1.bf16.msra.mxu0 %v1097
    %1478 = vmatprep.subr.bf16.mxu0 %v1094
    %1479 = vmatpush1.bf16.msra.mxu0 %v1093
    %1480 = vmatprep.subr.bf16.mxu0 %v1090
    %1481 = vmatpush1.bf16.msra.mxu0 %v1089
    %1482 = vmatprep.subr.bf16.mxu0 %v1150
    %1483 = vmatpush2.bf16.msra.mxu0 %v1149
    %1484 = vmatprep.subr.bf16.mxu0 %v1146
    %1485 = vmatpush2.bf16.msra.mxu0 %v1145
    %1486 = vmatprep.subr.bf16.mxu0 %v1142
    %1487 = vmatpush2.bf16.msra.mxu0 %v1141
    %1488 = vmatprep.subr.bf16.mxu0 %v1138
    %1489 = vmatpush2.bf16.msra.mxu0 %v1137
    %1490 = vmatprep.subr.bf16.mxu0 %v1134
    %1491 = vmatpush2.bf16.msra.mxu0 %v1133
    %1492 = vmatprep.subr.bf16.mxu0 %v1130
    %1493 = vmatpush2.bf16.msra.mxu0 %v1129
    %1494 = vmatprep.subr.bf16.mxu0 %v1126
    %1495 = vmatpush2.bf16.msra.mxu0 %v1125
    %1496 = vmatprep.subr.bf16.mxu0 %v1122
    %1497 = vmatpush2.bf16.msra.mxu0 %v1121
    %1498 = vmatprep.mubr.bf16.mxu0 %v146
    %1499 = vmatmul.mubr.bf16.gmra.mxu0 %v145
    %v1500 = vpop.f32.mrf.mxu0
    %v1501 = vadd.f32 %v1448, %v1500
    %v1502 = vpop.f32.mrf.mxu0
    %v1503 = vadd.f32 %v1450, %v1502
    %v1504 = vpop.f32.mrf.mxu0
    %v1505 = vadd.f32 %v1452, %v1504
    %v1506 = vpop.f32.mrf.mxu0
    %v1507 = vadd.f32 %v1454, %v1506
    %1508 = vmatprep.mubr.bf16.mxu0 %v153
    %1509 = vmatmul.mubr.bf16.gmra.mxu0 %v152
    %v1510 = vpop.f32.mrf.mxu0
    %v1511 = vadd.f32 %v1458, %v1510
    %v1512 = vpop.f32.mrf.mxu0
    %v1513 = vadd.f32 %v1460, %v1512
    %v1514 = vpop.f32.mrf.mxu0
    %v1515 = vadd.f32 %v1462, %v1514
    %v1516 = vpop.f32.mrf.mxu0
    %v1517 = vadd.f32 %v1464, %v1516
    %1518 = vdwg.mxu0
    %1519 = vmatprep.subr.bf16.mxu0 0
    %1520 = vmatpush1.bf16.msra.mxu0 0
    %1521 = vmatprep.subr.bf16.mxu0 0
    %1522 = vmatpush1.bf16.msra.mxu0 0
    %1523 = vmatprep.subr.bf16.mxu0 0
    %1524 = vmatpush1.bf16.msra.mxu0 0
    %1525 = vmatprep.subr.bf16.mxu0 0
    %1526 = vmatpush1.bf16.msra.mxu0 0
    %1527 = vmatprep.subr.bf16.mxu0 0
    %1528 = vmatpush1.bf16.msra.mxu0 0
    %1529 = vmatprep.subr.bf16.mxu0 0
    %1530 = vmatpush1.bf16.msra.mxu0 0
    %1531 = vmatprep.subr.bf16.mxu0 0
    %1532 = vmatpush1.bf16.msra.mxu0 0
    %1533 = vmatprep.subr.bf16.mxu0 %v1154
    %1534 = vmatpush1.bf16.msra.mxu0 %v1153
    %1535 = vmatprep.subr.bf16.mxu0 0
    %1536 = vmatpush2.bf16.msra.mxu0 0
    %1537 = vmatprep.subr.bf16.mxu0 0
    %1538 = vmatpush2.bf16.msra.mxu0 0
    %1539 = vmatprep.subr.bf16.mxu0 0
    %1540 = vmatpush2.bf16.msra.mxu0 0
    %1541 = vmatprep.subr.bf16.mxu0 0
    %1542 = vmatpush2.bf16.msra.mxu0 0
    %1543 = vmatprep.subr.bf16.mxu0 0
    %1544 = vmatpush2.bf16.msra.mxu0 0
    %1545 = vmatprep.subr.bf16.mxu0 0
    %1546 = vmatpush2.bf16.msra.mxu0 0
    %1547 = vmatprep.subr.bf16.mxu0 0
    %1548 = vmatpush2.bf16.msra.mxu0 0
    %1549 = vmatprep.subr.bf16.mxu0 0
    %1550 = vmatpush2.bf16.msra.mxu0 0
    %1551 = vmatprep.mubr.bf16.mxu0 0
    %1552 = vmatmul.mubr.bf16.gmra.mxu0 %v1355
    %v1553 = vpop.f32.mrf.mxu0
    %v1554 = vadd.f32 %v1501, %v1553
    %v1555 = vpop.f32.mrf.mxu0
    %v1556 = vadd.f32 %v1503, %v1555
    %v1557 = vpop.f32.mrf.mxu0
    %v1558 = vadd.f32 %v1505, %v1557
    %v1559 = vpop.f32.mrf.mxu0
    %v1560 = vadd.f32 %v1507, %v1559
    %1561 = vmatprep.mubr.bf16.mxu0 0
    %1562 = vmatmul.mubr.bf16.gmra.mxu0 %v1358
    %v1563 = vpop.f32.mrf.mxu0
    %v1564 = vadd.f32 %v1511, %v1563
    %v1565 = vpop.f32.mrf.mxu0
    %v1566 = vadd.f32 %v1513, %v1565
    %v1567 = vpop.f32.mrf.mxu0
    %v1568 = vadd.f32 %v1515, %v1567
    %v1569 = vpop.f32.mrf.mxu0
    %v1570 = vadd.f32 %v1517, %v1569
    %1571 = vdwg.mxu0
    %1572 = vmatprep.subr.bf16.mxu0 %v992
    %1573 = vmatpush1.bf16.msra.mxu0 %v991
    %1574 = vmatprep.subr.bf16.mxu0 %v988
    %1575 = vmatpush1.bf16.msra.mxu0 %v987
    %1576 = vmatprep.subr.bf16.mxu0 %v984
    %1577 = vmatpush1.bf16.msra.mxu0 %v983
    %1578 = vmatprep.subr.bf16.mxu0 %v980
    %1579 = vmatpush1.bf16.msra.mxu0 %v979
    %1580 = vmatprep.subr.bf16.mxu0 %v976
    %1581 = vmatpush1.bf16.msra.mxu0 %v975
    %1582 = vmatprep.subr.bf16.mxu0 %v972
    %1583 = vmatpush1.bf16.msra.mxu0 %v971
    %1584 = vmatprep.subr.bf16.mxu0 %v968
    %1585 = vmatpush1.bf16.msra.mxu0 %v967
    %1586 = vmatprep.subr.bf16.mxu0 %v964
    %1587 = vmatpush1.bf16.msra.mxu0 %v963
    %1588 = vmatprep.subr.bf16.mxu0 %v1024
    %1589 = vmatpush2.bf16.msra.mxu0 %v1023
    %1590 = vmatprep.subr.bf16.mxu0 %v1020
    %1591 = vmatpush2.bf16.msra.mxu0 %v1019
    %1592 = vmatprep.subr.bf16.mxu0 %v1016
    %1593 = vmatpush2.bf16.msra.mxu0 %v1015
    %1594 = vmatprep.subr.bf16.mxu0 %v1012
    %1595 = vmatpush2.bf16.msra.mxu0 %v1011
    %1596 = vmatprep.subr.bf16.mxu0 %v1008
    %1597 = vmatpush2.bf16.msra.mxu0 %v1007
    %1598 = vmatprep.subr.bf16.mxu0 %v1004
    %1599 = vmatpush2.bf16.msra.mxu0 %v1003
    %1600 = vmatprep.subr.bf16.mxu0 %v1000
    %1601 = vmatpush2.bf16.msra.mxu0 %v999
    %1602 = vmatprep.subr.bf16.mxu0 %v996
    %1603 = vmatpush2.bf16.msra.mxu0 %v995
    %1604 = vmatprep.mubr.bf16.mxu0 %v142
    %1605 = vmatmul.mubr.bf16.gmra.mxu0 %v141
    %v1606 = vpop.f32.mrf.mxu0
    %v1607 = vadd.f32 %v364, %v1606
    %v1608 = vpop.f32.mrf.mxu0
    %v1609 = vadd.f32 %v368, %v1608
    %v1610 = vpop.f32.mrf.mxu0
    %v1611 = vadd.f32 %v364, %v1610
    %v1612 = vpop.f32.mrf.mxu0
    %v1613 = vadd.f32 %v368, %v1612
    %1614 = vmatprep.mubr.bf16.mxu0 %v149
    %1615 = vmatmul.mubr.bf16.gmra.mxu0 %v148
    %v1616 = vpop.f32.mrf.mxu0
    %v1617 = vadd.f32 %v364, %v1616
    %v1618 = vpop.f32.mrf.mxu0
    %v1619 = vadd.f32 %v368, %v1618
    %v1620 = vpop.f32.mrf.mxu0
    %v1621 = vadd.f32 %v364, %v1620
    %v1622 = vpop.f32.mrf.mxu0
    %v1623 = vadd.f32 %v368, %v1622
    %1624 = vdwg.mxu0
    %1625 = vmatprep.subr.bf16.mxu0 %v1056
    %1626 = vmatpush1.bf16.msra.mxu0 %v1055
    %1627 = vmatprep.subr.bf16.mxu0 %v1052
    %1628 = vmatpush1.bf16.msra.mxu0 %v1051
    %1629 = vmatprep.subr.bf16.mxu0 %v1048
    %1630 = vmatpush1.bf16.msra.mxu0 %v1047
    %1631 = vmatprep.subr.bf16.mxu0 %v1044
    %1632 = vmatpush1.bf16.msra.mxu0 %v1043
    %1633 = vmatprep.subr.bf16.mxu0 %v1040
    %1634 = vmatpush1.bf16.msra.mxu0 %v1039
    %1635 = vmatprep.subr.bf16.mxu0 %v1036
    %1636 = vmatpush1.bf16.msra.mxu0 %v1035
    %1637 = vmatprep.subr.bf16.mxu0 %v1032
    %1638 = vmatpush1.bf16.msra.mxu0 %v1031
    %1639 = vmatprep.subr.bf16.mxu0 %v1028
    %1640 = vmatpush1.bf16.msra.mxu0 %v1027
    %1641 = vmatprep.subr.bf16.mxu0 %v1088
    %1642 = vmatpush2.bf16.msra.mxu0 %v1087
    %1643 = vmatprep.subr.bf16.mxu0 %v1084
    %1644 = vmatpush2.bf16.msra.mxu0 %v1083
    %1645 = vmatprep.subr.bf16.mxu0 %v1080
    %1646 = vmatpush2.bf16.msra.mxu0 %v1079
    %1647 = vmatprep.subr.bf16.mxu0 %v1076
    %1648 = vmatpush2.bf16.msra.mxu0 %v1075
    %1649 = vmatprep.subr.bf16.mxu0 %v1072
    %1650 = vmatpush2.bf16.msra.mxu0 %v1071
    %1651 = vmatprep.subr.bf16.mxu0 %v1068
    %1652 = vmatpush2.bf16.msra.mxu0 %v1067
    %1653 = vmatprep.subr.bf16.mxu0 %v1064
    %1654 = vmatpush2.bf16.msra.mxu0 %v1063
    %1655 = vmatprep.subr.bf16.mxu0 %v1060
    %1656 = vmatpush2.bf16.msra.mxu0 %v1059
    %1657 = vmatprep.mubr.bf16.mxu0 %v144
    %1658 = vmatmul.mubr.bf16.gmra.mxu0 %v143
    %v1659 = vpop.f32.mrf.mxu0
    %v1660 = vadd.f32 %v1607, %v1659
    %v1661 = vpop.f32.mrf.mxu0
    %v1662 = vadd.f32 %v1609, %v1661
    %v1663 = vpop.f32.mrf.mxu0
    %v1664 = vadd.f32 %v1611, %v1663
    %v1665 = vpop.f32.mrf.mxu0
    %v1666 = vadd.f32 %v1613, %v1665
    %1667 = vmatprep.mubr.bf16.mxu0 %v151
    %1668 = vmatmul.mubr.bf16.gmra.mxu0 %v150
    %v1669 = vpop.f32.mrf.mxu0
    %v1670 = vadd.f32 %v1617, %v1669
    %v1671 = vpop.f32.mrf.mxu0
    %v1672 = vadd.f32 %v1619, %v1671
    %v1673 = vpop.f32.mrf.mxu0
    %v1674 = vadd.f32 %v1621, %v1673
    %v1675 = vpop.f32.mrf.mxu0
    %v1676 = vadd.f32 %v1623, %v1675
    %1677 = vdwg.mxu0
    %1678 = vmatprep.subr.bf16.mxu0 %v1120
    %1679 = vmatpush1.bf16.msra.mxu0 %v1119
    %1680 = vmatprep.subr.bf16.mxu0 %v1116
    %1681 = vmatpush1.bf16.msra.mxu0 %v1115
    %1682 = vmatprep.subr.bf16.mxu0 %v1112
    %1683 = vmatpush1.bf16.msra.mxu0 %v1111
    %1684 = vmatprep.subr.bf16.mxu0 %v1108
    %1685 = vmatpush1.bf16.msra.mxu0 %v1107
    %1686 = vmatprep.subr.bf16.mxu0 %v1104
    %1687 = vmatpush1.bf16.msra.mxu0 %v1103
    %1688 = vmatprep.subr.bf16.mxu0 %v1100
    %1689 = vmatpush1.bf16.msra.mxu0 %v1099
    %1690 = vmatprep.subr.bf16.mxu0 %v1096
    %1691 = vmatpush1.bf16.msra.mxu0 %v1095
    %1692 = vmatprep.subr.bf16.mxu0 %v1092
    %1693 = vmatpush1.bf16.msra.mxu0 %v1091
    %1694 = vmatprep.subr.bf16.mxu0 %v1152
    %1695 = vmatpush2.bf16.msra.mxu0 %v1151
    %1696 = vmatprep.subr.bf16.mxu0 %v1148
    %1697 = vmatpush2.bf16.msra.mxu0 %v1147
    %1698 = vmatprep.subr.bf16.mxu0 %v1144
    %1699 = vmatpush2.bf16.msra.mxu0 %v1143
    %1700 = vmatprep.subr.bf16.mxu0 %v1140
    %1701 = vmatpush2.bf16.msra.mxu0 %v1139
    %1702 = vmatprep.subr.bf16.mxu0 %v1136
    %1703 = vmatpush2.bf16.msra.mxu0 %v1135
    %1704 = vmatprep.subr.bf16.mxu0 %v1132
    %1705 = vmatpush2.bf16.msra.mxu0 %v1131
    %1706 = vmatprep.subr.bf16.mxu0 %v1128
    %1707 = vmatpush2.bf16.msra.mxu0 %v1127
    %1708 = vmatprep.subr.bf16.mxu0 %v1124
    %1709 = vmatpush2.bf16.msra.mxu0 %v1123
    %1710 = vmatprep.mubr.bf16.mxu0 %v146
    %1711 = vmatmul.mubr.bf16.gmra.mxu0 %v145
    %v1712 = vpop.f32.mrf.mxu0
    %v1713 = vadd.f32 %v1660, %v1712
    %v1714 = vpop.f32.mrf.mxu0
    %v1715 = vadd.f32 %v1662, %v1714
    %v1716 = vpop.f32.mrf.mxu0
    %v1717 = vadd.f32 %v1664, %v1716
    %v1718 = vpop.f32.mrf.mxu0
    %v1719 = vadd.f32 %v1666, %v1718
    %1720 = vmatprep.mubr.bf16.mxu0 %v153
    %1721 = vmatmul.mubr.bf16.gmra.mxu0 %v152
    %v1722 = vpop.f32.mrf.mxu0
    %v1723 = vadd.f32 %v1670, %v1722
    %v1724 = vpop.f32.mrf.mxu0
    %v1725 = vadd.f32 %v1672, %v1724
    %v1726 = vpop.f32.mrf.mxu0
    %v1727 = vadd.f32 %v1674, %v1726
    %v1728 = vpop.f32.mrf.mxu0
    %v1729 = vadd.f32 %v1676, %v1728
    %1730 = vdwg.mxu0
    %1731 = vmatprep.subr.bf16.mxu0 0
    %1732 = vmatpush1.bf16.msra.mxu0 0
    %1733 = vmatprep.subr.bf16.mxu0 0
    %1734 = vmatpush1.bf16.msra.mxu0 0
    %1735 = vmatprep.subr.bf16.mxu0 0
    %1736 = vmatpush1.bf16.msra.mxu0 0
    %1737 = vmatprep.subr.bf16.mxu0 0
    %1738 = vmatpush1.bf16.msra.mxu0 0
    %1739 = vmatprep.subr.bf16.mxu0 0
    %1740 = vmatpush1.bf16.msra.mxu0 0
    %1741 = vmatprep.subr.bf16.mxu0 0
    %1742 = vmatpush1.bf16.msra.mxu0 0
    %1743 = vmatprep.subr.bf16.mxu0 0
    %1744 = vmatpush1.bf16.msra.mxu0 0
    %1745 = vmatprep.subr.bf16.mxu0 %v1156
    %1746 = vmatpush1.bf16.msra.mxu0 %v1155
    %1747 = vmatprep.subr.bf16.mxu0 0
    %1748 = vmatpush2.bf16.msra.mxu0 0
    %1749 = vmatprep.subr.bf16.mxu0 0
    %1750 = vmatpush2.bf16.msra.mxu0 0
    %1751 = vmatprep.subr.bf16.mxu0 0
    %1752 = vmatpush2.bf16.msra.mxu0 0
    %1753 = vmatprep.subr.bf16.mxu0 0
    %1754 = vmatpush2.bf16.msra.mxu0 0
    %1755 = vmatprep.subr.bf16.mxu0 0
    %1756 = vmatpush2.bf16.msra.mxu0 0
    %1757 = vmatprep.subr.bf16.mxu0 0
    %1758 = vmatpush2.bf16.msra.mxu0 0
    %1759 = vmatprep.subr.bf16.mxu0 0
    %1760 = vmatpush2.bf16.msra.mxu0 0
    %1761 = vmatprep.subr.bf16.mxu0 0
    %1762 = vmatpush2.bf16.msra.mxu0 0
    %1763 = vmatprep.mubr.bf16.mxu0 0
    %1764 = vmatmul.mubr.bf16.gmra.mxu0 %v1355
    %v1765 = vpop.f32.mrf.mxu0
    %v1766 = vadd.f32 %v1713, %v1765
    %v1767 = vpop.f32.mrf.mxu0
    %v1768 = vadd.f32 %v1715, %v1767
    %v1769 = vpop.f32.mrf.mxu0
    %v1770 = vadd.f32 %v1717, %v1769
    %v1771 = vpop.f32.mrf.mxu0
    %v1772 = vadd.f32 %v1719, %v1771
    %1773 = vmatprep.mubr.bf16.mxu0 0
    %1774 = vmatmul.mubr.bf16.gmra.mxu0 %v1358
    %v1775 = vpop.f32.mrf.mxu0
    %v1776 = vadd.f32 %v1723, %v1775
    %v1777 = vpop.f32.mrf.mxu0
    %v1778 = vadd.f32 %v1725, %v1777
    %v1779 = vpop.f32.mrf.mxu0
    %v1780 = vadd.f32 %v1727, %v1779
    %v1781 = vpop.f32.mrf.mxu0
    %v1782 = vadd.f32 %v1729, %v1781
    %1783 = vdwg.mxu0
    %v1784 = vmax.f32 %v1554, 0.0
    %v1785 = vmax.f32 %v1556, 0.0
    %v1786 = vmax.f32 %v1766, 0.0
    %v1787 = vmax.f32 %v1768, 0.0
    %v1788 = vmax.f32 %v1558, 0.0
    %v1789 = vmax.f32 %v1560, 0.0
    %v1790 = vmax.f32 %v1770, 0.0
    %v1791 = vmax.f32 %v1772, 0.0
    %v1792 = vmax.f32 %v1564, 0.0
    %v1793 = vmax.f32 %v1566, 0.0
    %v1794 = vmax.f32 %v1776, 0.0
    %v1795 = vmax.f32 %v1778, 0.0
    %v1796 = vmax.f32 %v1568, 0.0
    %v1797 = vmax.f32 %v1570, 0.0
    %v1798 = vmax.f32 %v1780, 0.0
    %v1799 = vmax.f32 %v1782, 0.0
    %v1800 = vpack.c.bf16 %v1788, %v1784
    %v1801 = vpack.c.bf16 %v1789, %v1785
    %v1802 = vpack.c.bf16 %v1790, %v1786
    %v1803 = vpack.c.bf16 %v1791, %v1787
    %v1804 = vpack.c.bf16 %v1796, %v1792
    %v1805 = vpack.c.bf16 %v1797, %v1793
    %v1806 = vpack.c.bf16 %v1798, %v1794
    %v1807 = vpack.c.bf16 %v1799, %v1795
    %v1808 = vld [vmem:[#allocation7] sm:$0xff]
    %v1809 = vld [vmem:[#allocation7 + $0x8] sm:$0xff]
    %v1810 = vld [vmem:[#allocation7 + $0x10] sm:$0xff]
    %v1811 = vld [vmem:[#allocation7 + $0x18] sm:$0xff]
    %v1812 = vld [vmem:[#allocation7 + $0x20] sm:$0xff]
    %v1813 = vld [vmem:[#allocation7 + $0x28] sm:$0xff]
    %v1814 = vld [vmem:[#allocation7 + $0x30] sm:$0xff]
    %v1815 = vld [vmem:[#allocation7 + $0x38] sm:$0xff]
    %v1816 = vld [vmem:[#allocation7 + $0x40] sm:$0xff]
    %v1817 = vld [vmem:[#allocation7 + $0x48] sm:$0xff]
    %v1818 = vld [vmem:[#allocation7 + $0x50] sm:$0xff]
    %v1819 = vld [vmem:[#allocation7 + $0x58] sm:$0xff]
    %v1820 = vld [vmem:[#allocation7 + $0x60] sm:$0xff]
    %v1821 = vld [vmem:[#allocation7 + $0x68] sm:$0xff]
    %v1822 = vld [vmem:[#allocation7 + $0x70] sm:$0xff]
    %v1823 = vld [vmem:[#allocation7 + $0x78] sm:$0xff]
    %v1824 = vld [vmem:[#allocation7 + $0x80] sm:$0xff]
    %v1825 = vld [vmem:[#allocation7 + $0x88] sm:$0xff]
    %v1826 = vld [vmem:[#allocation7 + $0x90] sm:$0xff]
    %v1827 = vld [vmem:[#allocation7 + $0x98] sm:$0xff]
    %v1828 = vld [vmem:[#allocation7 + $0xa0] sm:$0xff]
    %v1829 = vld [vmem:[#allocation7 + $0xa8] sm:$0xff]
    %v1830 = vld [vmem:[#allocation7 + $0xb0] sm:$0xff]
    %v1831 = vld [vmem:[#allocation7 + $0xb8] sm:$0xff]
    %v1832 = vld [vmem:[#allocation7 + $0xc0] sm:$0xff]
    %v1833 = vld [vmem:[#allocation7 + $0xc8] sm:$0xff]
    %v1834 = vld [vmem:[#allocation7 + $0xd0] sm:$0xff]
    %v1835 = vld [vmem:[#allocation7 + $0xd8] sm:$0xff]
    %v1836 = vld [vmem:[#allocation7 + $0xe0] sm:$0xff]
    %v1837 = vld [vmem:[#allocation7 + $0xe8] sm:$0xff]
    %v1838 = vld [vmem:[#allocation7 + $0xf0] sm:$0xff]
    %v1839 = vld [vmem:[#allocation7 + $0xf8] sm:$0xff]
    %v1840 = vld [vmem:[#allocation7 + $0x100] sm:$0xff]
    %v1841 = vld [vmem:[#allocation7 + $0x108] sm:$0xff]
    %v1842 = vld [vmem:[#allocation7 + $0x110] sm:$0xff]
    %v1843 = vld [vmem:[#allocation7 + $0x118] sm:$0xff]
    %v1844 = vld [vmem:[#allocation7 + $0x120] sm:$0xff]
    %v1845 = vld [vmem:[#allocation7 + $0x128] sm:$0xff]
    %v1846 = vld [vmem:[#allocation7 + $0x130] sm:$0xff]
    %v1847 = vld [vmem:[#allocation7 + $0x138] sm:$0xff]
    %v1848 = vld [vmem:[#allocation7 + $0x140] sm:$0xff]
    %v1849 = vld [vmem:[#allocation7 + $0x148] sm:$0xff]
    %v1850 = vld [vmem:[#allocation7 + $0x150] sm:$0xff]
    %v1851 = vld [vmem:[#allocation7 + $0x158] sm:$0xff]
    %v1852 = vld [vmem:[#allocation7 + $0x160] sm:$0xff]
    %v1853 = vld [vmem:[#allocation7 + $0x168] sm:$0xff]
    %v1854 = vld [vmem:[#allocation7 + $0x170] sm:$0xff]
    %v1855 = vld [vmem:[#allocation7 + $0x178] sm:$0xff]
    %v1856 = vld [vmem:[#allocation7 + $0x180] sm:$0xff]
    %v1857 = vld [vmem:[#allocation7 + $0x188] sm:$0xff]
    %v1858 = vld [vmem:[#allocation7 + $0x190] sm:$0xff]
    %v1859 = vld [vmem:[#allocation7 + $0x198] sm:$0xff]
    %v1860 = vld [vmem:[#allocation7 + $0x1a0] sm:$0xff]
    %v1861 = vld [vmem:[#allocation7 + $0x1a8] sm:$0xff]
    %v1862 = vld [vmem:[#allocation7 + $0x1b0] sm:$0xff]
    %v1863 = vld [vmem:[#allocation7 + $0x1b8] sm:$0xff]
    %v1864 = vld [vmem:[#allocation7 + $0x1c0] sm:$0xff]
    %v1865 = vld [vmem:[#allocation7 + $0x1c8] sm:$0xff]
    %v1866 = vld [vmem:[#allocation7 + $0x1d0] sm:$0xff]
    %v1867 = vld [vmem:[#allocation7 + $0x1d8] sm:$0xff]
    %v1868 = vld [vmem:[#allocation7 + $0x1e0] sm:$0xff]
    %v1869 = vld [vmem:[#allocation7 + $0x1e8] sm:$0xff]
    %v1870 = vld [vmem:[#allocation7 + $0x1f0] sm:$0xff]
    %v1871 = vld [vmem:[#allocation7 + $0x1f8] sm:$0xff]
    %v1872 = vld [vmem:[#allocation7 + $0x200] sm:$0xff]
    %v1873 = vld [vmem:[#allocation7 + $0x208] sm:$0xff]
    %v1874 = vld [vmem:[#allocation7 + $0x210] sm:$0xff]
    %v1875 = vld [vmem:[#allocation7 + $0x218] sm:$0xff]
    %v1876 = vld [vmem:[#allocation7 + $0x220] sm:$0xff]
    %v1877 = vld [vmem:[#allocation7 + $0x228] sm:$0xff]
    %v1878 = vld [vmem:[#allocation7 + $0x230] sm:$0xff]
    %v1879 = vld [vmem:[#allocation7 + $0x238] sm:$0xff]
    %v1880 = vld [vmem:[#allocation7 + $0x240] sm:$0xff]
    %v1881 = vld [vmem:[#allocation7 + $0x248] sm:$0xff]
    %v1882 = vld [vmem:[#allocation7 + $0x250] sm:$0xff]
    %v1883 = vld [vmem:[#allocation7 + $0x258] sm:$0xff]
    %v1884 = vld [vmem:[#allocation7 + $0x260] sm:$0xff]
    %v1885 = vld [vmem:[#allocation7 + $0x268] sm:$0xff]
    %v1886 = vld [vmem:[#allocation7 + $0x270] sm:$0xff]
    %v1887 = vld [vmem:[#allocation7 + $0x278] sm:$0xff]
    %v1888 = vld [vmem:[#allocation7 + $0x280] sm:$0xff]
    %v1889 = vld [vmem:[#allocation7 + $0x288] sm:$0xff]
    %v1890 = vld [vmem:[#allocation7 + $0x290] sm:$0xff]
    %v1891 = vld [vmem:[#allocation7 + $0x298] sm:$0xff]
    %v1892 = vld [vmem:[#allocation7 + $0x2a0] sm:$0xff]
    %v1893 = vld [vmem:[#allocation7 + $0x2a8] sm:$0xff]
    %v1894 = vld [vmem:[#allocation7 + $0x2b0] sm:$0xff]
    %v1895 = vld [vmem:[#allocation7 + $0x2b8] sm:$0xff]
    %v1896 = vld [vmem:[#allocation7 + $0x2c0] sm:$0xff]
    %v1897 = vld [vmem:[#allocation7 + $0x2c8] sm:$0xff]
    %v1898 = vld [vmem:[#allocation7 + $0x2d0] sm:$0xff]
    %v1899 = vld [vmem:[#allocation7 + $0x2d8] sm:$0xff]
    %v1900 = vld [vmem:[#allocation7 + $0x2e0] sm:$0xff]
    %v1901 = vld [vmem:[#allocation7 + $0x2e8] sm:$0xff]
    %v1902 = vld [vmem:[#allocation7 + $0x2f0] sm:$0xff]
    %v1903 = vld [vmem:[#allocation7 + $0x2f8] sm:$0xff]
    %v1904 = vld [vmem:[#allocation7 + $0x300] sm:$0xff]
    %v1905 = vld [vmem:[#allocation7 + $0x308] sm:$0xff]
    %v1906 = vld [vmem:[#allocation7 + $0x310] sm:$0xff]
    %v1907 = vld [vmem:[#allocation7 + $0x318] sm:$0xff]
    %v1908 = vld [vmem:[#allocation7 + $0x320] sm:$0xff]
    %v1909 = vld [vmem:[#allocation7 + $0x328] sm:$0xff]
    %v1910 = vld [vmem:[#allocation7 + $0x330] sm:$0xff]
    %v1911 = vld [vmem:[#allocation7 + $0x338] sm:$0xff]
    %v1912 = vld [vmem:[#allocation7 + $0x340] sm:$0xff]
    %v1913 = vld [vmem:[#allocation7 + $0x348] sm:$0xff]
    %v1914 = vld [vmem:[#allocation7 + $0x350] sm:$0xff]
    %v1915 = vld [vmem:[#allocation7 + $0x358] sm:$0xff]
    %v1916 = vld [vmem:[#allocation7 + $0x360] sm:$0xff]
    %v1917 = vld [vmem:[#allocation7 + $0x368] sm:$0xff]
    %v1918 = vld [vmem:[#allocation7 + $0x370] sm:$0xff]
    %v1919 = vld [vmem:[#allocation7 + $0x378] sm:$0xff]
    %v1920 = vld [vmem:[#allocation7 + $0x380] sm:$0xff]
    %v1921 = vld [vmem:[#allocation7 + $0x388] sm:$0xff]
    %v1922 = vld [vmem:[#allocation7 + $0x390] sm:$0xff]
    %v1923 = vld [vmem:[#allocation7 + $0x398] sm:$0xff]
    %v1924 = vld [vmem:[#allocation7 + $0x3a0] sm:$0xff]
    %v1925 = vld [vmem:[#allocation7 + $0x3a8] sm:$0xff]
    %v1926 = vld [vmem:[#allocation7 + $0x3b0] sm:$0xff]
    %v1927 = vld [vmem:[#allocation7 + $0x3b8] sm:$0xff]
    %v1928 = vld [vmem:[#allocation7 + $0x3c0] sm:$0xff]
    %v1929 = vld [vmem:[#allocation7 + $0x3c8] sm:$0xff]
    %v1930 = vld [vmem:[#allocation7 + $0x3d0] sm:$0xff]
    %v1931 = vld [vmem:[#allocation7 + $0x3d8] sm:$0xff]
    %v1932 = vld [vmem:[#allocation7 + $0x3e0] sm:$0xff]
    %v1933 = vld [vmem:[#allocation7 + $0x3e8] sm:$0xff]
    %v1934 = vld [vmem:[#allocation7 + $0x3f0] sm:$0xff]
    %v1935 = vld [vmem:[#allocation7 + $0x3f8] sm:$0xff]
    %v1936 = vld [vmem:[%s4] sm:$0xf]
    %v1938 = vlaneseq
    %v1939 = vshrl.u32 %v1938, 7
    %v1940 = vsub.s32 0, %v1939
    %v1941 = vrot.slane %v1936, %v1940
    %v1942 = vlaneseq
    %v1943 = vshrl.u32 %v1942, 7
    %v1944 = vsub.s32 1, %v1943
    %v1945 = vrot.slane %v1936, %v1944
    %v1946 = vlaneseq
    %v1947 = vshrl.u32 %v1946, 7
    %v1948 = vsub.s32 2, %v1947
    %v1949 = vrot.slane %v1936, %v1948
    %v1950 = vlaneseq
    %v1951 = vshrl.u32 %v1950, 7
    %v1952 = vsub.s32 3, %v1951
    %v1953 = vrot.slane %v1936, %v1952
    %v2086 = vunpack.c.l.b16 %v1808
    %v2087 = vunpack.c.h.b16 %v1808
    %v2088 = vunpack.c.l.b16 %v1809
    %v2089 = vunpack.c.h.b16 %v1809
    %v2090 = vunpack.c.l.b16 %v1810
    %v2091 = vunpack.c.h.b16 %v1810
    %v2092 = vunpack.c.l.b16 %v1811
    %v2093 = vunpack.c.h.b16 %v1811
    %v2094 = vunpack.c.l.b16 %v1812
    %v2095 = vunpack.c.h.b16 %v1812
    %v2096 = vunpack.c.l.b16 %v1813
    %v2097 = vunpack.c.h.b16 %v1813
    %v2098 = vunpack.c.l.b16 %v1814
    %v2099 = vunpack.c.h.b16 %v1814
    %v2100 = vunpack.c.l.b16 %v1815
    %v2101 = vunpack.c.h.b16 %v1815
    %v2102 = vunpack.c.l.b16 %v1816
    %v2103 = vunpack.c.h.b16 %v1816
    %v2104 = vunpack.c.l.b16 %v1817
    %v2105 = vunpack.c.h.b16 %v1817
    %v2106 = vunpack.c.l.b16 %v1818
    %v2107 = vunpack.c.h.b16 %v1818
    %v2108 = vunpack.c.l.b16 %v1819
    %v2109 = vunpack.c.h.b16 %v1819
    %v2110 = vunpack.c.l.b16 %v1820
    %v2111 = vunpack.c.h.b16 %v1820
    %v2112 = vunpack.c.l.b16 %v1821
    %v2113 = vunpack.c.h.b16 %v1821
    %v2114 = vunpack.c.l.b16 %v1822
    %v2115 = vunpack.c.h.b16 %v1822
    %v2116 = vunpack.c.l.b16 %v1823
    %v2117 = vunpack.c.h.b16 %v1823
    %v2118 = vunpack.c.l.b16 %v1824
    %v2119 = vunpack.c.h.b16 %v1824
    %v2120 = vunpack.c.l.b16 %v1825
    %v2121 = vunpack.c.h.b16 %v1825
    %v2122 = vunpack.c.l.b16 %v1826
    %v2123 = vunpack.c.h.b16 %v1826
    %v2124 = vunpack.c.l.b16 %v1827
    %v2125 = vunpack.c.h.b16 %v1827
    %v2126 = vunpack.c.l.b16 %v1828
    %v2127 = vunpack.c.h.b16 %v1828
    %v2128 = vunpack.c.l.b16 %v1829
    %v2129 = vunpack.c.h.b16 %v1829
    %v2130 = vunpack.c.l.b16 %v1830
    %v2131 = vunpack.c.h.b16 %v1830
    %v2132 = vunpack.c.l.b16 %v1831
    %v2133 = vunpack.c.h.b16 %v1831
    %v2134 = vunpack.c.l.b16 %v1832
    %v2135 = vunpack.c.h.b16 %v1832
    %v2136 = vunpack.c.l.b16 %v1833
    %v2137 = vunpack.c.h.b16 %v1833
    %v2138 = vunpack.c.l.b16 %v1834
    %v2139 = vunpack.c.h.b16 %v1834
    %v2140 = vunpack.c.l.b16 %v1835
    %v2141 = vunpack.c.h.b16 %v1835
    %v2142 = vunpack.c.l.b16 %v1836
    %v2143 = vunpack.c.h.b16 %v1836
    %v2144 = vunpack.c.l.b16 %v1837
    %v2145 = vunpack.c.h.b16 %v1837
    %v2146 = vunpack.c.l.b16 %v1838
    %v2147 = vunpack.c.h.b16 %v1838
    %v2148 = vunpack.c.l.b16 %v1839
    %v2149 = vunpack.c.h.b16 %v1839
    %v2150 = vunpack.c.l.b16 %v1840
    %v2151 = vunpack.c.h.b16 %v1840
    %v2152 = vunpack.c.l.b16 %v1841
    %v2153 = vunpack.c.h.b16 %v1841
    %v2154 = vunpack.c.l.b16 %v1842
    %v2155 = vunpack.c.h.b16 %v1842
    %v2156 = vunpack.c.l.b16 %v1843
    %v2157 = vunpack.c.h.b16 %v1843
    %v2158 = vunpack.c.l.b16 %v1844
    %v2159 = vunpack.c.h.b16 %v1844
    %v2160 = vunpack.c.l.b16 %v1845
    %v2161 = vunpack.c.h.b16 %v1845
    %v2162 = vunpack.c.l.b16 %v1846
    %v2163 = vunpack.c.h.b16 %v1846
    %v2164 = vunpack.c.l.b16 %v1847
    %v2165 = vunpack.c.h.b16 %v1847
    %v2166 = vunpack.c.l.b16 %v1848
    %v2167 = vunpack.c.h.b16 %v1848
    %v2168 = vunpack.c.l.b16 %v1849
    %v2169 = vunpack.c.h.b16 %v1849
    %v2170 = vunpack.c.l.b16 %v1850
    %v2171 = vunpack.c.h.b16 %v1850
    %v2172 = vunpack.c.l.b16 %v1851
    %v2173 = vunpack.c.h.b16 %v1851
    %v2174 = vunpack.c.l.b16 %v1852
    %v2175 = vunpack.c.h.b16 %v1852
    %v2176 = vunpack.c.l.b16 %v1853
    %v2177 = vunpack.c.h.b16 %v1853
    %v2178 = vunpack.c.l.b16 %v1854
    %v2179 = vunpack.c.h.b16 %v1854
    %v2180 = vunpack.c.l.b16 %v1855
    %v2181 = vunpack.c.h.b16 %v1855
    %v2182 = vunpack.c.l.b16 %v1856
    %v2183 = vunpack.c.h.b16 %v1856
    %v2184 = vunpack.c.l.b16 %v1857
    %v2185 = vunpack.c.h.b16 %v1857
    %v2186 = vunpack.c.l.b16 %v1858
    %v2187 = vunpack.c.h.b16 %v1858
    %v2188 = vunpack.c.l.b16 %v1859
    %v2189 = vunpack.c.h.b16 %v1859
    %v2190 = vunpack.c.l.b16 %v1860
    %v2191 = vunpack.c.h.b16 %v1860
    %v2192 = vunpack.c.l.b16 %v1861
    %v2193 = vunpack.c.h.b16 %v1861
    %v2194 = vunpack.c.l.b16 %v1862
    %v2195 = vunpack.c.h.b16 %v1862
    %v2196 = vunpack.c.l.b16 %v1863
    %v2197 = vunpack.c.h.b16 %v1863
    %v2198 = vunpack.c.l.b16 %v1864
    %v2199 = vunpack.c.h.b16 %v1864
    %v2200 = vunpack.c.l.b16 %v1865
    %v2201 = vunpack.c.h.b16 %v1865
    %v2202 = vunpack.c.l.b16 %v1866
    %v2203 = vunpack.c.h.b16 %v1866
    %v2204 = vunpack.c.l.b16 %v1867
    %v2205 = vunpack.c.h.b16 %v1867
    %v2206 = vunpack.c.l.b16 %v1868
    %v2207 = vunpack.c.h.b16 %v1868
    %v2208 = vunpack.c.l.b16 %v1869
    %v2209 = vunpack.c.h.b16 %v1869
    %v2210 = vunpack.c.l.b16 %v1870
    %v2211 = vunpack.c.h.b16 %v1870
    %v2212 = vunpack.c.l.b16 %v1871
    %v2213 = vunpack.c.h.b16 %v1871
    %v2214 = vunpack.c.l.b16 %v1872
    %v2215 = vunpack.c.h.b16 %v1872
    %v2216 = vunpack.c.l.b16 %v1873
    %v2217 = vunpack.c.h.b16 %v1873
    %v2218 = vunpack.c.l.b16 %v1874
    %v2219 = vunpack.c.h.b16 %v1874
    %v2220 = vunpack.c.l.b16 %v1875
    %v2221 = vunpack.c.h.b16 %v1875
    %v2222 = vunpack.c.l.b16 %v1876
    %v2223 = vunpack.c.h.b16 %v1876
    %v2224 = vunpack.c.l.b16 %v1877
    %v2225 = vunpack.c.h.b16 %v1877
    %v2226 = vunpack.c.l.b16 %v1878
    %v2227 = vunpack.c.h.b16 %v1878
    %v2228 = vunpack.c.l.b16 %v1879
    %v2229 = vunpack.c.h.b16 %v1879
    %v2230 = vunpack.c.l.b16 %v1880
    %v2231 = vunpack.c.h.b16 %v1880
    %v2232 = vunpack.c.l.b16 %v1881
    %v2233 = vunpack.c.h.b16 %v1881
    %v2234 = vunpack.c.l.b16 %v1882
    %v2235 = vunpack.c.h.b16 %v1882
    %v2236 = vunpack.c.l.b16 %v1883
    %v2237 = vunpack.c.h.b16 %v1883
    %v2238 = vunpack.c.l.b16 %v1884
    %v2239 = vunpack.c.h.b16 %v1884
    %v2240 = vunpack.c.l.b16 %v1885
    %v2241 = vunpack.c.h.b16 %v1885
    %v2242 = vunpack.c.l.b16 %v1886
    %v2243 = vunpack.c.h.b16 %v1886
    %v2244 = vunpack.c.l.b16 %v1887
    %v2245 = vunpack.c.h.b16 %v1887
    %v2246 = vunpack.c.l.b16 %v1888
    %v2247 = vunpack.c.h.b16 %v1888
    %v2248 = vunpack.c.l.b16 %v1889
    %v2249 = vunpack.c.h.b16 %v1889
    %v2250 = vunpack.c.l.b16 %v1890
    %v2251 = vunpack.c.h.b16 %v1890
    %v2252 = vunpack.c.l.b16 %v1891
    %v2253 = vunpack.c.h.b16 %v1891
    %v2254 = vunpack.c.l.b16 %v1892
    %v2255 = vunpack.c.h.b16 %v1892
    %v2256 = vunpack.c.l.b16 %v1893
    %v2257 = vunpack.c.h.b16 %v1893
    %v2258 = vunpack.c.l.b16 %v1894
    %v2259 = vunpack.c.h.b16 %v1894
    %v2260 = vunpack.c.l.b16 %v1895
    %v2261 = vunpack.c.h.b16 %v1895
    %v2262 = vunpack.c.l.b16 %v1896
    %v2263 = vunpack.c.h.b16 %v1896
    %v2264 = vunpack.c.l.b16 %v1897
    %v2265 = vunpack.c.h.b16 %v1897
    %v2266 = vunpack.c.l.b16 %v1898
    %v2267 = vunpack.c.h.b16 %v1898
    %v2268 = vunpack.c.l.b16 %v1899
    %v2269 = vunpack.c.h.b16 %v1899
    %v2270 = vunpack.c.l.b16 %v1900
    %v2271 = vunpack.c.h.b16 %v1900
    %v2272 = vunpack.c.l.b16 %v1901
    %v2273 = vunpack.c.h.b16 %v1901
    %v2274 = vunpack.c.l.b16 %v1902
    %v2275 = vunpack.c.h.b16 %v1902
    %v2276 = vunpack.c.l.b16 %v1903
    %v2277 = vunpack.c.h.b16 %v1903
    %v2278 = vunpack.c.l.b16 %v1904
    %v2279 = vunpack.c.h.b16 %v1904
    %v2280 = vunpack.c.l.b16 %v1905
    %v2281 = vunpack.c.h.b16 %v1905
    %v2282 = vunpack.c.l.b16 %v1906
    %v2283 = vunpack.c.h.b16 %v1906
    %v2284 = vunpack.c.l.b16 %v1907
    %v2285 = vunpack.c.h.b16 %v1907
    %v2286 = vunpack.c.l.b16 %v1908
    %v2287 = vunpack.c.h.b16 %v1908
    %v2288 = vunpack.c.l.b16 %v1909
    %v2289 = vunpack.c.h.b16 %v1909
    %v2290 = vunpack.c.l.b16 %v1910
    %v2291 = vunpack.c.h.b16 %v1910
    %v2292 = vunpack.c.l.b16 %v1911
    %v2293 = vunpack.c.h.b16 %v1911
    %v2294 = vunpack.c.l.b16 %v1912
    %v2295 = vunpack.c.h.b16 %v1912
    %v2296 = vunpack.c.l.b16 %v1913
    %v2297 = vunpack.c.h.b16 %v1913
    %v2298 = vunpack.c.l.b16 %v1914
    %v2299 = vunpack.c.h.b16 %v1914
    %v2300 = vunpack.c.l.b16 %v1915
    %v2301 = vunpack.c.h.b16 %v1915
    %v2302 = vunpack.c.l.b16 %v1916
    %v2303 = vunpack.c.h.b16 %v1916
    %v2304 = vunpack.c.l.b16 %v1917
    %v2305 = vunpack.c.h.b16 %v1917
    %v2306 = vunpack.c.l.b16 %v1918
    %v2307 = vunpack.c.h.b16 %v1918
    %v2308 = vunpack.c.l.b16 %v1919
    %v2309 = vunpack.c.h.b16 %v1919
    %v2310 = vunpack.c.l.b16 %v1920
    %v2311 = vunpack.c.h.b16 %v1920
    %v2312 = vunpack.c.l.b16 %v1921
    %v2313 = vunpack.c.h.b16 %v1921
    %v2314 = vunpack.c.l.b16 %v1922
    %v2315 = vunpack.c.h.b16 %v1922
    %v2316 = vunpack.c.l.b16 %v1923
    %v2317 = vunpack.c.h.b16 %v1923
    %v2318 = vunpack.c.l.b16 %v1924
    %v2319 = vunpack.c.h.b16 %v1924
    %v2320 = vunpack.c.l.b16 %v1925
    %v2321 = vunpack.c.h.b16 %v1925
    %v2322 = vunpack.c.l.b16 %v1926
    %v2323 = vunpack.c.h.b16 %v1926
    %v2324 = vunpack.c.l.b16 %v1927
    %v2325 = vunpack.c.h.b16 %v1927
    %v2326 = vunpack.c.l.b16 %v1928
    %v2327 = vunpack.c.h.b16 %v1928
    %v2328 = vunpack.c.l.b16 %v1929
    %v2329 = vunpack.c.h.b16 %v1929
    %v2330 = vunpack.c.l.b16 %v1930
    %v2331 = vunpack.c.h.b16 %v1930
    %v2332 = vunpack.c.l.b16 %v1931
    %v2333 = vunpack.c.h.b16 %v1931
    %v2334 = vunpack.c.l.b16 %v1932
    %v2335 = vunpack.c.h.b16 %v1932
    %v2336 = vunpack.c.l.b16 %v1933
    %v2337 = vunpack.c.h.b16 %v1933
    %v2338 = vunpack.c.l.b16 %v1934
    %v2339 = vunpack.c.h.b16 %v1934
    %v2340 = vunpack.c.l.b16 %v1935
    %v2341 = vunpack.c.h.b16 %v1935
    %v2342 = vpack.c.b16 %v2090, %v2086
    %v2343 = vpack.c.b16 %v2091, %v2087
    %v2344 = vpack.c.b16 %v2092, %v2088
    %v2345 = vpack.c.b16 %v2093, %v2089
    %v2346 = vpack.c.b16 %v2098, %v2094
    %v2347 = vpack.c.b16 %v2099, %v2095
    %v2348 = vpack.c.b16 %v2100, %v2096
    %v2349 = vpack.c.b16 %v2101, %v2097
    %v2350 = vpack.c.b16 %v2106, %v2102
    %v2351 = vpack.c.b16 %v2107, %v2103
    %v2352 = vpack.c.b16 %v2108, %v2104
    %v2353 = vpack.c.b16 %v2109, %v2105
    %v2354 = vpack.c.b16 %v2114, %v2110
    %v2355 = vpack.c.b16 %v2115, %v2111
    %v2356 = vpack.c.b16 %v2116, %v2112
    %v2357 = vpack.c.b16 %v2117, %v2113
    %v2358 = vpack.c.b16 %v2122, %v2118
    %v2359 = vpack.c.b16 %v2123, %v2119
    %v2360 = vpack.c.b16 %v2124, %v2120
    %v2361 = vpack.c.b16 %v2125, %v2121
    %v2362 = vpack.c.b16 %v2130, %v2126
    %v2363 = vpack.c.b16 %v2131, %v2127
    %v2364 = vpack.c.b16 %v2132, %v2128
    %v2365 = vpack.c.b16 %v2133, %v2129
    %v2366 = vpack.c.b16 %v2138, %v2134
    %v2367 = vpack.c.b16 %v2139, %v2135
    %v2368 = vpack.c.b16 %v2140, %v2136
    %v2369 = vpack.c.b16 %v2141, %v2137
    %v2370 = vpack.c.b16 %v2146, %v2142
    %v2371 = vpack.c.b16 %v2147, %v2143
    %v2372 = vpack.c.b16 %v2148, %v2144
    %v2373 = vpack.c.b16 %v2149, %v2145
    %v2374 = vpack.c.b16 %v2154, %v2150
    %v2375 = vpack.c.b16 %v2155, %v2151
    %v2376 = vpack.c.b16 %v2156, %v2152
    %v2377 = vpack.c.b16 %v2157, %v2153
    %v2378 = vpack.c.b16 %v2162, %v2158
    %v2379 = vpack.c.b16 %v2163, %v2159
    %v2380 = vpack.c.b16 %v2164, %v2160
    %v2381 = vpack.c.b16 %v2165, %v2161
    %v2382 = vpack.c.b16 %v2170, %v2166
    %v2383 = vpack.c.b16 %v2171, %v2167
    %v2384 = vpack.c.b16 %v2172, %v2168
    %v2385 = vpack.c.b16 %v2173, %v2169
    %v2386 = vpack.c.b16 %v2178, %v2174
    %v2387 = vpack.c.b16 %v2179, %v2175
    %v2388 = vpack.c.b16 %v2180, %v2176
    %v2389 = vpack.c.b16 %v2181, %v2177
    %v2390 = vpack.c.b16 %v2186, %v2182
    %v2391 = vpack.c.b16 %v2187, %v2183
    %v2392 = vpack.c.b16 %v2188, %v2184
    %v2393 = vpack.c.b16 %v2189, %v2185
    %v2394 = vpack.c.b16 %v2194, %v2190
    %v2395 = vpack.c.b16 %v2195, %v2191
    %v2396 = vpack.c.b16 %v2196, %v2192
    %v2397 = vpack.c.b16 %v2197, %v2193
    %v2398 = vpack.c.b16 %v2202, %v2198
    %v2399 = vpack.c.b16 %v2203, %v2199
    %v2400 = vpack.c.b16 %v2204, %v2200
    %v2401 = vpack.c.b16 %v2205, %v2201
    %v2402 = vpack.c.b16 %v2210, %v2206
    %v2403 = vpack.c.b16 %v2211, %v2207
    %v2404 = vpack.c.b16 %v2212, %v2208
    %v2405 = vpack.c.b16 %v2213, %v2209
    %v2406 = vpack.c.b16 %v2218, %v2214
    %v2407 = vpack.c.b16 %v2219, %v2215
    %v2408 = vpack.c.b16 %v2220, %v2216
    %v2409 = vpack.c.b16 %v2221, %v2217
    %v2410 = vpack.c.b16 %v2226, %v2222
    %v2411 = vpack.c.b16 %v2227, %v2223
    %v2412 = vpack.c.b16 %v2228, %v2224
    %v2413 = vpack.c.b16 %v2229, %v2225
    %v2414 = vpack.c.b16 %v2234, %v2230
    %v2415 = vpack.c.b16 %v2235, %v2231
    %v2416 = vpack.c.b16 %v2236, %v2232
    %v2417 = vpack.c.b16 %v2237, %v2233
    %v2418 = vpack.c.b16 %v2242, %v2238
    %v2419 = vpack.c.b16 %v2243, %v2239
    %v2420 = vpack.c.b16 %v2244, %v2240
    %v2421 = vpack.c.b16 %v2245, %v2241
    %v2422 = vpack.c.b16 %v2250, %v2246
    %v2423 = vpack.c.b16 %v2251, %v2247
    %v2424 = vpack.c.b16 %v2252, %v2248
    %v2425 = vpack.c.b16 %v2253, %v2249
    %v2426 = vpack.c.b16 %v2258, %v2254
    %v2427 = vpack.c.b16 %v2259, %v2255
    %v2428 = vpack.c.b16 %v2260, %v2256
    %v2429 = vpack.c.b16 %v2261, %v2257
    %v2430 = vpack.c.b16 %v2266, %v2262
    %v2431 = vpack.c.b16 %v2267, %v2263
    %v2432 = vpack.c.b16 %v2268, %v2264
    %v2433 = vpack.c.b16 %v2269, %v2265
    %v2434 = vpack.c.b16 %v2274, %v2270
    %v2435 = vpack.c.b16 %v2275, %v2271
    %v2436 = vpack.c.b16 %v2276, %v2272
    %v2437 = vpack.c.b16 %v2277, %v2273
    %v2438 = vpack.c.b16 %v2282, %v2278
    %v2439 = vpack.c.b16 %v2283, %v2279
    %v2440 = vpack.c.b16 %v2284, %v2280
    %v2441 = vpack.c.b16 %v2285, %v2281
    %v2442 = vpack.c.b16 %v2290, %v2286
    %v2443 = vpack.c.b16 %v2291, %v2287
    %v2444 = vpack.c.b16 %v2292, %v2288
    %v2445 = vpack.c.b16 %v2293, %v2289
    %v2446 = vpack.c.b16 %v2298, %v2294
    %v2447 = vpack.c.b16 %v2299, %v2295
    %v2448 = vpack.c.b16 %v2300, %v2296
    %v2449 = vpack.c.b16 %v2301, %v2297
    %v2450 = vpack.c.b16 %v2306, %v2302
    %v2451 = vpack.c.b16 %v2307, %v2303
    %v2452 = vpack.c.b16 %v2308, %v2304
    %v2453 = vpack.c.b16 %v2309, %v2305
    %v2454 = vpack.c.b16 %v2314, %v2310
    %v2455 = vpack.c.b16 %v2315, %v2311
    %v2456 = vpack.c.b16 %v2316, %v2312
    %v2457 = vpack.c.b16 %v2317, %v2313
    %v2458 = vpack.c.b16 %v2322, %v2318
    %v2459 = vpack.c.b16 %v2323, %v2319
    %v2460 = vpack.c.b16 %v2324, %v2320
    %v2461 = vpack.c.b16 %v2325, %v2321
    %v2462 = vpack.c.b16 %v2330, %v2326
    %v2463 = vpack.c.b16 %v2331, %v2327
    %v2464 = vpack.c.b16 %v2332, %v2328
    %v2465 = vpack.c.b16 %v2333, %v2329
    %v2466 = vpack.c.b16 %v2338, %v2334
    %v2467 = vpack.c.b16 %v2339, %v2335
    %v2468 = vpack.c.b16 %v2340, %v2336
    %v2469 = vpack.c.b16 %v2341, %v2337
    %2598 = vmatprep.subr.bf16.mxu0 %v2371
    %2599 = vmatpush1.bf16.msra.mxu0 %v2370
    %2600 = vmatprep.subr.bf16.mxu0 %v2367
    %2601 = vmatpush1.bf16.msra.mxu0 %v2366
    %2602 = vmatprep.subr.bf16.mxu0 %v2363
    %2603 = vmatpush1.bf16.msra.mxu0 %v2362
    %2604 = vmatprep.subr.bf16.mxu0 %v2359
    %2605 = vmatpush1.bf16.msra.mxu0 %v2358
    %2606 = vmatprep.subr.bf16.mxu0 %v2355
    %2607 = vmatpush1.bf16.msra.mxu0 %v2354
    %2608 = vmatprep.subr.bf16.mxu0 %v2351
    %2609 = vmatpush1.bf16.msra.mxu0 %v2350
    %2610 = vmatprep.subr.bf16.mxu0 %v2347
    %2611 = vmatpush1.bf16.msra.mxu0 %v2346
    %2612 = vmatprep.subr.bf16.mxu0 %v2343
    %2613 = vmatpush1.bf16.msra.mxu0 %v2342
    %2614 = vmatprep.subr.bf16.mxu0 %v2403
    %2615 = vmatpush2.bf16.msra.mxu0 %v2402
    %2616 = vmatprep.subr.bf16.mxu0 %v2399
    %2617 = vmatpush2.bf16.msra.mxu0 %v2398
    %2618 = vmatprep.subr.bf16.mxu0 %v2395
    %2619 = vmatpush2.bf16.msra.mxu0 %v2394
    %2620 = vmatprep.subr.bf16.mxu0 %v2391
    %2621 = vmatpush2.bf16.msra.mxu0 %v2390
    %2622 = vmatprep.subr.bf16.mxu0 %v2387
    %2623 = vmatpush2.bf16.msra.mxu0 %v2386
    %2624 = vmatprep.subr.bf16.mxu0 %v2383
    %2625 = vmatpush2.bf16.msra.mxu0 %v2382
    %2626 = vmatprep.subr.bf16.mxu0 %v2379
    %2627 = vmatpush2.bf16.msra.mxu0 %v2378
    %2628 = vmatprep.subr.bf16.mxu0 %v2375
    %2629 = vmatpush2.bf16.msra.mxu0 %v2374
    %2630 = vmatprep.mubr.bf16.mxu0 %v1801
    %2631 = vmatmul.mubr.bf16.gmra.mxu0 %v1800
    %v2632 = vpop.f32.mrf.mxu0
    %v2633 = vadd.f32 %v1941, %v2632
    %v2634 = vpop.f32.mrf.mxu0
    %v2635 = vadd.f32 %v1945, %v2634
    %v2636 = vpop.f32.mrf.mxu0
    %v2637 = vadd.f32 %v1941, %v2636
    %v2638 = vpop.f32.mrf.mxu0
    %v2639 = vadd.f32 %v1945, %v2638
    %2640 = vmatprep.mubr.bf16.mxu0 %v1805
    %2641 = vmatmul.mubr.bf16.gmra.mxu0 %v1804
    %v2642 = vpop.f32.mrf.mxu0
    %v2643 = vadd.f32 %v1941, %v2642
    %v2644 = vpop.f32.mrf.mxu0
    %v2645 = vadd.f32 %v1945, %v2644
    %v2646 = vpop.f32.mrf.mxu0
    %v2647 = vadd.f32 %v1941, %v2646
    %v2648 = vpop.f32.mrf.mxu0
    %v2649 = vadd.f32 %v1945, %v2648
    %2650 = vdwg.mxu0
    %2651 = vmatprep.subr.bf16.mxu0 %v2435
    %2652 = vmatpush1.bf16.msra.mxu0 %v2434
    %2653 = vmatprep.subr.bf16.mxu0 %v2431
    %2654 = vmatpush1.bf16.msra.mxu0 %v2430
    %2655 = vmatprep.subr.bf16.mxu0 %v2427
    %2656 = vmatpush1.bf16.msra.mxu0 %v2426
    %2657 = vmatprep.subr.bf16.mxu0 %v2423
    %2658 = vmatpush1.bf16.msra.mxu0 %v2422
    %2659 = vmatprep.subr.bf16.mxu0 %v2419
    %2660 = vmatpush1.bf16.msra.mxu0 %v2418
    %2661 = vmatprep.subr.bf16.mxu0 %v2415
    %2662 = vmatpush1.bf16.msra.mxu0 %v2414
    %2663 = vmatprep.subr.bf16.mxu0 %v2411
    %2664 = vmatpush1.bf16.msra.mxu0 %v2410
    %2665 = vmatprep.subr.bf16.mxu0 %v2407
    %2666 = vmatpush1.bf16.msra.mxu0 %v2406
    %2667 = vmatprep.subr.bf16.mxu0 %v2467
    %2668 = vmatpush2.bf16.msra.mxu0 %v2466
    %2669 = vmatprep.subr.bf16.mxu0 %v2463
    %2670 = vmatpush2.bf16.msra.mxu0 %v2462
    %2671 = vmatprep.subr.bf16.mxu0 %v2459
    %2672 = vmatpush2.bf16.msra.mxu0 %v2458
    %2673 = vmatprep.subr.bf16.mxu0 %v2455
    %2674 = vmatpush2.bf16.msra.mxu0 %v2454
    %2675 = vmatprep.subr.bf16.mxu0 %v2451
    %2676 = vmatpush2.bf16.msra.mxu0 %v2450
    %2677 = vmatprep.subr.bf16.mxu0 %v2447
    %2678 = vmatpush2.bf16.msra.mxu0 %v2446
    %2679 = vmatprep.subr.bf16.mxu0 %v2443
    %2680 = vmatpush2.bf16.msra.mxu0 %v2442
    %2681 = vmatprep.subr.bf16.mxu0 %v2439
    %2682 = vmatpush2.bf16.msra.mxu0 %v2438
    %2683 = vmatprep.mubr.bf16.mxu0 %v1803
    %2684 = vmatmul.mubr.bf16.gmra.mxu0 %v1802
    %v2685 = vpop.f32.mrf.mxu0
    %v2686 = vadd.f32 %v2633, %v2685
    %v2687 = vpop.f32.mrf.mxu0
    %v2688 = vadd.f32 %v2635, %v2687
    %v2689 = vpop.f32.mrf.mxu0
    %v2690 = vadd.f32 %v2637, %v2689
    %v2691 = vpop.f32.mrf.mxu0
    %v2692 = vadd.f32 %v2639, %v2691
    %2693 = vmatprep.mubr.bf16.mxu0 %v1807
    %2694 = vmatmul.mubr.bf16.gmra.mxu0 %v1806
    %v2695 = vpop.f32.mrf.mxu0
    %v2696 = vadd.f32 %v2643, %v2695
    %v2697 = vpop.f32.mrf.mxu0
    %v2698 = vadd.f32 %v2645, %v2697
    %v2699 = vpop.f32.mrf.mxu0
    %v2700 = vadd.f32 %v2647, %v2699
    %v2701 = vpop.f32.mrf.mxu0
    %v2702 = vadd.f32 %v2649, %v2701
    %2703 = vdwg.mxu0
    %2704 = vmatprep.subr.bf16.mxu0 %v2373
    %2705 = vmatpush1.bf16.msra.mxu0 %v2372
    %2706 = vmatprep.subr.bf16.mxu0 %v2369
    %2707 = vmatpush1.bf16.msra.mxu0 %v2368
    %2708 = vmatprep.subr.bf16.mxu0 %v2365
    %2709 = vmatpush1.bf16.msra.mxu0 %v2364
    %2710 = vmatprep.subr.bf16.mxu0 %v2361
    %2711 = vmatpush1.bf16.msra.mxu0 %v2360
    %2712 = vmatprep.subr.bf16.mxu0 %v2357
    %2713 = vmatpush1.bf16.msra.mxu0 %v2356
    %2714 = vmatprep.subr.bf16.mxu0 %v2353
    %2715 = vmatpush1.bf16.msra.mxu0 %v2352
    %2716 = vmatprep.subr.bf16.mxu0 %v2349
    %2717 = vmatpush1.bf16.msra.mxu0 %v2348
    %2718 = vmatprep.subr.bf16.mxu0 %v2345
    %2719 = vmatpush1.bf16.msra.mxu0 %v2344
    %2720 = vmatprep.subr.bf16.mxu0 %v2405
    %2721 = vmatpush2.bf16.msra.mxu0 %v2404
    %2722 = vmatprep.subr.bf16.mxu0 %v2401
    %2723 = vmatpush2.bf16.msra.mxu0 %v2400
    %2724 = vmatprep.subr.bf16.mxu0 %v2397
    %2725 = vmatpush2.bf16.msra.mxu0 %v2396
    %2726 = vmatprep.subr.bf16.mxu0 %v2393
    %2727 = vmatpush2.bf16.msra.mxu0 %v2392
    %2728 = vmatprep.subr.bf16.mxu0 %v2389
    %2729 = vmatpush2.bf16.msra.mxu0 %v2388
    %2730 = vmatprep.subr.bf16.mxu0 %v2385
    %2731 = vmatpush2.bf16.msra.mxu0 %v2384
    %2732 = vmatprep.subr.bf16.mxu0 %v2381
    %2733 = vmatpush2.bf16.msra.mxu0 %v2380
    %2734 = vmatprep.subr.bf16.mxu0 %v2377
    %2735 = vmatpush2.bf16.msra.mxu0 %v2376
    %2736 = vmatprep.mubr.bf16.mxu0 %v1801
    %2737 = vmatmul.mubr.bf16.gmra.mxu0 %v1800
    %v2738 = vpop.f32.mrf.mxu0
    %v2739 = vadd.f32 %v1949, %v2738
    %v2740 = vpop.f32.mrf.mxu0
    %v2741 = vadd.f32 %v1953, %v2740
    %v2742 = vpop.f32.mrf.mxu0
    %v2743 = vadd.f32 %v1949, %v2742
    %v2744 = vpop.f32.mrf.mxu0
    %v2745 = vadd.f32 %v1953, %v2744
    %2746 = vmatprep.mubr.bf16.mxu0 %v1805
    %2747 = vmatmul.mubr.bf16.gmra.mxu0 %v1804
    %v2748 = vpop.f32.mrf.mxu0
    %v2749 = vadd.f32 %v1949, %v2748
    %v2750 = vpop.f32.mrf.mxu0
    %v2751 = vadd.f32 %v1953, %v2750
    %v2752 = vpop.f32.mrf.mxu0
    %v2753 = vadd.f32 %v1949, %v2752
    %v2754 = vpop.f32.mrf.mxu0
    %v2755 = vadd.f32 %v1953, %v2754
    %2756 = vdwg.mxu0
    %2757 = vmatprep.subr.bf16.mxu0 %v2437
    %2758 = vmatpush1.bf16.msra.mxu0 %v2436
    %2759 = vmatprep.subr.bf16.mxu0 %v2433
    %2760 = vmatpush1.bf16.msra.mxu0 %v2432
    %2761 = vmatprep.subr.bf16.mxu0 %v2429
    %2762 = vmatpush1.bf16.msra.mxu0 %v2428
    %2763 = vmatprep.subr.bf16.mxu0 %v2425
    %2764 = vmatpush1.bf16.msra.mxu0 %v2424
    %2765 = vmatprep.subr.bf16.mxu0 %v2421
    %2766 = vmatpush1.bf16.msra.mxu0 %v2420
    %2767 = vmatprep.subr.bf16.mxu0 %v2417
    %2768 = vmatpush1.bf16.msra.mxu0 %v2416
    %2769 = vmatprep.subr.bf16.mxu0 %v2413
    %2770 = vmatpush1.bf16.msra.mxu0 %v2412
    %2771 = vmatprep.subr.bf16.mxu0 %v2409
    %2772 = vmatpush1.bf16.msra.mxu0 %v2408
    %2773 = vmatprep.subr.bf16.mxu0 %v2469
    %2774 = vmatpush2.bf16.msra.mxu0 %v2468
    %2775 = vmatprep.subr.bf16.mxu0 %v2465
    %2776 = vmatpush2.bf16.msra.mxu0 %v2464
    %2777 = vmatprep.subr.bf16.mxu0 %v2461
    %2778 = vmatpush2.bf16.msra.mxu0 %v2460
    %2779 = vmatprep.subr.bf16.mxu0 %v2457
    %2780 = vmatpush2.bf16.msra.mxu0 %v2456
    %2781 = vmatprep.subr.bf16.mxu0 %v2453
    %2782 = vmatpush2.bf16.msra.mxu0 %v2452
    %2783 = vmatprep.subr.bf16.mxu0 %v2449
    %2784 = vmatpush2.bf16.msra.mxu0 %v2448
    %2785 = vmatprep.subr.bf16.mxu0 %v2445
    %2786 = vmatpush2.bf16.msra.mxu0 %v2444
    %2787 = vmatprep.subr.bf16.mxu0 %v2441
    %2788 = vmatpush2.bf16.msra.mxu0 %v2440
    %2789 = vmatprep.mubr.bf16.mxu0 %v1803
    %2790 = vmatmul.mubr.bf16.gmra.mxu0 %v1802
    %v2791 = vpop.f32.mrf.mxu0
    %v2792 = vadd.f32 %v2739, %v2791
    %v2793 = vpop.f32.mrf.mxu0
    %v2794 = vadd.f32 %v2741, %v2793
    %v2795 = vpop.f32.mrf.mxu0
    %v2796 = vadd.f32 %v2743, %v2795
    %v2797 = vpop.f32.mrf.mxu0
    %v2798 = vadd.f32 %v2745, %v2797
    %2799 = vmatprep.mubr.bf16.mxu0 %v1807
    %2800 = vmatmul.mubr.bf16.gmra.mxu0 %v1806
    %v2801 = vpop.f32.mrf.mxu0
    %v2802 = vadd.f32 %v2749, %v2801
    %v2803 = vpop.f32.mrf.mxu0
    %v2804 = vadd.f32 %v2751, %v2803
    %v2805 = vpop.f32.mrf.mxu0
    %v2806 = vadd.f32 %v2753, %v2805
    %v2807 = vpop.f32.mrf.mxu0
    %v2808 = vadd.f32 %v2755, %v2807
    %2809 = vdwg.mxu0
    %v2810 = vmax.f32 %v2686, 0.0
    %v2811 = vmax.f32 %v2688, 0.0
    %v2812 = vmax.f32 %v2792, 0.0
    %v2813 = vmax.f32 %v2794, 0.0
    %v2814 = vmax.f32 %v2690, 0.0
    %v2815 = vmax.f32 %v2692, 0.0
    %v2816 = vmax.f32 %v2796, 0.0
    %v2817 = vmax.f32 %v2798, 0.0
    %v2818 = vmax.f32 %v2696, 0.0
    %v2819 = vmax.f32 %v2698, 0.0
    %v2820 = vmax.f32 %v2802, 0.0
    %v2821 = vmax.f32 %v2804, 0.0
    %v2822 = vmax.f32 %v2700, 0.0
    %v2823 = vmax.f32 %v2702, 0.0
    %v2824 = vmax.f32 %v2806, 0.0
    %v2825 = vmax.f32 %v2808, 0.0
    %v2826 = vpack.c.bf16 %v2814, %v2810
    %v2827 = vpack.c.bf16 %v2815, %v2811
    %v2828 = vpack.c.bf16 %v2816, %v2812
    %v2829 = vpack.c.bf16 %v2817, %v2813
    %v2830 = vpack.c.bf16 %v2822, %v2818
    %v2831 = vpack.c.bf16 %v2823, %v2819
    %v2832 = vpack.c.bf16 %v2824, %v2820
    %v2833 = vpack.c.bf16 %v2825, %v2821
    %v2834 = vld [vmem:[#allocation9] sm:$0xff]
    %v2835 = vld [vmem:[#allocation9 + $0x8] sm:$0xff]
    %v2836 = vld [vmem:[#allocation9 + $0x10] sm:$0xff]
    %v2837 = vld [vmem:[#allocation9 + $0x18] sm:$0xff]
    %v2838 = vld [vmem:[#allocation9 + $0x20] sm:$0xff]
    %v2839 = vld [vmem:[#allocation9 + $0x28] sm:$0xff]
    %v2840 = vld [vmem:[#allocation9 + $0x30] sm:$0xff]
    %v2841 = vld [vmem:[#allocation9 + $0x38] sm:$0xff]
    %v2842 = vld [vmem:[#allocation9 + $0x40] sm:$0xff]
    %v2843 = vld [vmem:[#allocation9 + $0x48] sm:$0xff]
    %v2844 = vld [vmem:[#allocation9 + $0x50] sm:$0xff]
    %v2845 = vld [vmem:[#allocation9 + $0x58] sm:$0xff]
    %v2846 = vld [vmem:[#allocation9 + $0x60] sm:$0xff]
    %v2847 = vld [vmem:[#allocation9 + $0x68] sm:$0xff]
    %v2848 = vld [vmem:[#allocation9 + $0x70] sm:$0xff]
    %v2849 = vld [vmem:[#allocation9 + $0x78] sm:$0xff]
    %v2850 = vld [vmem:[#allocation9 + $0x80] sm:$0xff]
    %v2851 = vld [vmem:[#allocation9 + $0x88] sm:$0xff]
    %v2852 = vld [vmem:[#allocation9 + $0x90] sm:$0xff]
    %v2853 = vld [vmem:[#allocation9 + $0x98] sm:$0xff]
    %v2854 = vld [vmem:[#allocation9 + $0xa0] sm:$0xff]
    %v2855 = vld [vmem:[#allocation9 + $0xa8] sm:$0xff]
    %v2856 = vld [vmem:[#allocation9 + $0xb0] sm:$0xff]
    %v2857 = vld [vmem:[#allocation9 + $0xb8] sm:$0xff]
    %v2858 = vld [vmem:[#allocation9 + $0xc0] sm:$0xff]
    %v2859 = vld [vmem:[#allocation9 + $0xc8] sm:$0xff]
    %v2860 = vld [vmem:[#allocation9 + $0xd0] sm:$0xff]
    %v2861 = vld [vmem:[#allocation9 + $0xd8] sm:$0xff]
    %v2862 = vld [vmem:[#allocation9 + $0xe0] sm:$0xff]
    %v2863 = vld [vmem:[#allocation9 + $0xe8] sm:$0xff]
    %v2864 = vld [vmem:[#allocation9 + $0xf0] sm:$0xff]
    %v2865 = vld [vmem:[#allocation9 + $0xf8] sm:$0xff]
    %v2866 = vld [vmem:[#allocation9 + $0x100] sm:$0xff]
    %v2867 = vld [vmem:[#allocation9 + $0x108] sm:$0xff]
    %v2868 = vld [vmem:[#allocation9 + $0x110] sm:$0xff]
    %v2869 = vld [vmem:[#allocation9 + $0x118] sm:$0xff]
    %v2870 = vld [vmem:[#allocation9 + $0x120] sm:$0xff]
    %v2871 = vld [vmem:[#allocation9 + $0x128] sm:$0xff]
    %v2872 = vld [vmem:[#allocation9 + $0x130] sm:$0xff]
    %v2873 = vld [vmem:[#allocation9 + $0x138] sm:$0xff]
    %v2874 = vld [vmem:[#allocation9 + $0x140] sm:$0xff]
    %v2875 = vld [vmem:[#allocation9 + $0x148] sm:$0xff]
    %v2876 = vld [vmem:[#allocation9 + $0x150] sm:$0xff]
    %v2877 = vld [vmem:[#allocation9 + $0x158] sm:$0xff]
    %v2878 = vld [vmem:[#allocation9 + $0x160] sm:$0xff]
    %v2879 = vld [vmem:[#allocation9 + $0x168] sm:$0xff]
    %v2880 = vld [vmem:[#allocation9 + $0x170] sm:$0xff]
    %v2881 = vld [vmem:[#allocation9 + $0x178] sm:$0xff]
    %v2882 = vld [vmem:[#allocation9 + $0x180] sm:$0xff]
    %v2883 = vld [vmem:[#allocation9 + $0x188] sm:$0xff]
    %v2884 = vld [vmem:[#allocation9 + $0x190] sm:$0xff]
    %v2885 = vld [vmem:[#allocation9 + $0x198] sm:$0xff]
    %v2886 = vld [vmem:[#allocation9 + $0x1a0] sm:$0xff]
    %v2887 = vld [vmem:[#allocation9 + $0x1a8] sm:$0xff]
    %v2888 = vld [vmem:[#allocation9 + $0x1b0] sm:$0xff]
    %v2889 = vld [vmem:[#allocation9 + $0x1b8] sm:$0xff]
    %v2890 = vld [vmem:[#allocation9 + $0x1c0] sm:$0xff]
    %v2891 = vld [vmem:[#allocation9 + $0x1c8] sm:$0xff]
    %v2892 = vld [vmem:[#allocation9 + $0x1d0] sm:$0xff]
    %v2893 = vld [vmem:[#allocation9 + $0x1d8] sm:$0xff]
    %v2894 = vld [vmem:[#allocation9 + $0x1e0] sm:$0xff]
    %v2895 = vld [vmem:[#allocation9 + $0x1e8] sm:$0xff]
    %v2896 = vld [vmem:[#allocation9 + $0x1f0] sm:$0xff]
    %v2897 = vld [vmem:[#allocation9 + $0x1f8] sm:$0xff]
    %v2898 = vld [vmem:[%s6] sm:$0x3]
    %v2900 = vlaneseq
    %v2901 = vshrl.u32 %v2900, 7
    %v2902 = vsub.s32 0, %v2901
    %v2903 = vrot.slane %v2898, %v2902
    %v2904 = vlaneseq
    %v2905 = vshrl.u32 %v2904, 7
    %v2906 = vsub.s32 1, %v2905
    %v2907 = vrot.slane %v2898, %v2906
    %v2974 = vunpack.c.l.b16 %v2834
    %v2975 = vunpack.c.h.b16 %v2834
    %v2976 = vunpack.c.l.b16 %v2835
    %v2977 = vunpack.c.h.b16 %v2835
    %v2978 = vunpack.c.l.b16 %v2836
    %v2979 = vunpack.c.h.b16 %v2836
    %v2980 = vunpack.c.l.b16 %v2837
    %v2981 = vunpack.c.h.b16 %v2837
    %v2982 = vunpack.c.l.b16 %v2838
    %v2983 = vunpack.c.h.b16 %v2838
    %v2984 = vunpack.c.l.b16 %v2839
    %v2985 = vunpack.c.h.b16 %v2839
    %v2986 = vunpack.c.l.b16 %v2840
    %v2987 = vunpack.c.h.b16 %v2840
    %v2988 = vunpack.c.l.b16 %v2841
    %v2989 = vunpack.c.h.b16 %v2841
    %v2990 = vunpack.c.l.b16 %v2842
    %v2991 = vunpack.c.h.b16 %v2842
    %v2992 = vunpack.c.l.b16 %v2843
    %v2993 = vunpack.c.h.b16 %v2843
    %v2994 = vunpack.c.l.b16 %v2844
    %v2995 = vunpack.c.h.b16 %v2844
    %v2996 = vunpack.c.l.b16 %v2845
    %v2997 = vunpack.c.h.b16 %v2845
    %v2998 = vunpack.c.l.b16 %v2846
    %v2999 = vunpack.c.h.b16 %v2846
    %v3000 = vunpack.c.l.b16 %v2847
    %v3001 = vunpack.c.h.b16 %v2847
    %v3002 = vunpack.c.l.b16 %v2848
    %v3003 = vunpack.c.h.b16 %v2848
    %v3004 = vunpack.c.l.b16 %v2849
    %v3005 = vunpack.c.h.b16 %v2849
    %v3006 = vunpack.c.l.b16 %v2850
    %v3007 = vunpack.c.h.b16 %v2850
    %v3008 = vunpack.c.l.b16 %v2851
    %v3009 = vunpack.c.h.b16 %v2851
    %v3010 = vunpack.c.l.b16 %v2852
    %v3011 = vunpack.c.h.b16 %v2852
    %v3012 = vunpack.c.l.b16 %v2853
    %v3013 = vunpack.c.h.b16 %v2853
    %v3014 = vunpack.c.l.b16 %v2854
    %v3015 = vunpack.c.h.b16 %v2854
    %v3016 = vunpack.c.l.b16 %v2855
    %v3017 = vunpack.c.h.b16 %v2855
    %v3018 = vunpack.c.l.b16 %v2856
    %v3019 = vunpack.c.h.b16 %v2856
    %v3020 = vunpack.c.l.b16 %v2857
    %v3021 = vunpack.c.h.b16 %v2857
    %v3022 = vunpack.c.l.b16 %v2858
    %v3023 = vunpack.c.h.b16 %v2858
    %v3024 = vunpack.c.l.b16 %v2859
    %v3025 = vunpack.c.h.b16 %v2859
    %v3026 = vunpack.c.l.b16 %v2860
    %v3027 = vunpack.c.h.b16 %v2860
    %v3028 = vunpack.c.l.b16 %v2861
    %v3029 = vunpack.c.h.b16 %v2861
    %v3030 = vunpack.c.l.b16 %v2862
    %v3031 = vunpack.c.h.b16 %v2862
    %v3032 = vunpack.c.l.b16 %v2863
    %v3033 = vunpack.c.h.b16 %v2863
    %v3034 = vunpack.c.l.b16 %v2864
    %v3035 = vunpack.c.h.b16 %v2864
    %v3036 = vunpack.c.l.b16 %v2865
    %v3037 = vunpack.c.h.b16 %v2865
    %v3038 = vunpack.c.l.b16 %v2866
    %v3039 = vunpack.c.h.b16 %v2866
    %v3040 = vunpack.c.l.b16 %v2867
    %v3041 = vunpack.c.h.b16 %v2867
    %v3042 = vunpack.c.l.b16 %v2868
    %v3043 = vunpack.c.h.b16 %v2868
    %v3044 = vunpack.c.l.b16 %v2869
    %v3045 = vunpack.c.h.b16 %v2869
    %v3046 = vunpack.c.l.b16 %v2870
    %v3047 = vunpack.c.h.b16 %v2870
    %v3048 = vunpack.c.l.b16 %v2871
    %v3049 = vunpack.c.h.b16 %v2871
    %v3050 = vunpack.c.l.b16 %v2872
    %v3051 = vunpack.c.h.b16 %v2872
    %v3052 = vunpack.c.l.b16 %v2873
    %v3053 = vunpack.c.h.b16 %v2873
    %v3054 = vunpack.c.l.b16 %v2874
    %v3055 = vunpack.c.h.b16 %v2874
    %v3056 = vunpack.c.l.b16 %v2875
    %v3057 = vunpack.c.h.b16 %v2875
    %v3058 = vunpack.c.l.b16 %v2876
    %v3059 = vunpack.c.h.b16 %v2876
    %v3060 = vunpack.c.l.b16 %v2877
    %v3061 = vunpack.c.h.b16 %v2877
    %v3062 = vunpack.c.l.b16 %v2878
    %v3063 = vunpack.c.h.b16 %v2878
    %v3064 = vunpack.c.l.b16 %v2879
    %v3065 = vunpack.c.h.b16 %v2879
    %v3066 = vunpack.c.l.b16 %v2880
    %v3067 = vunpack.c.h.b16 %v2880
    %v3068 = vunpack.c.l.b16 %v2881
    %v3069 = vunpack.c.h.b16 %v2881
    %v3070 = vunpack.c.l.b16 %v2882
    %v3071 = vunpack.c.h.b16 %v2882
    %v3072 = vunpack.c.l.b16 %v2883
    %v3073 = vunpack.c.h.b16 %v2883
    %v3074 = vunpack.c.l.b16 %v2884
    %v3075 = vunpack.c.h.b16 %v2884
    %v3076 = vunpack.c.l.b16 %v2885
    %v3077 = vunpack.c.h.b16 %v2885
    %v3078 = vunpack.c.l.b16 %v2886
    %v3079 = vunpack.c.h.b16 %v2886
    %v3080 = vunpack.c.l.b16 %v2887
    %v3081 = vunpack.c.h.b16 %v2887
    %v3082 = vunpack.c.l.b16 %v2888
    %v3083 = vunpack.c.h.b16 %v2888
    %v3084 = vunpack.c.l.b16 %v2889
    %v3085 = vunpack.c.h.b16 %v2889
    %v3086 = vunpack.c.l.b16 %v2890
    %v3087 = vunpack.c.h.b16 %v2890
    %v3088 = vunpack.c.l.b16 %v2891
    %v3089 = vunpack.c.h.b16 %v2891
    %v3090 = vunpack.c.l.b16 %v2892
    %v3091 = vunpack.c.h.b16 %v2892
    %v3092 = vunpack.c.l.b16 %v2893
    %v3093 = vunpack.c.h.b16 %v2893
    %v3094 = vunpack.c.l.b16 %v2894
    %v3095 = vunpack.c.h.b16 %v2894
    %v3096 = vunpack.c.l.b16 %v2895
    %v3097 = vunpack.c.h.b16 %v2895
    %v3098 = vunpack.c.l.b16 %v2896
    %v3099 = vunpack.c.h.b16 %v2896
    %v3100 = vunpack.c.l.b16 %v2897
    %v3101 = vunpack.c.h.b16 %v2897
    %v3102 = vpack.c.b16 %v2976, %v2974
    %v3103 = vpack.c.b16 %v2977, %v2975
    %v3104 = vpack.c.b16 %v2980, %v2978
    %v3105 = vpack.c.b16 %v2981, %v2979
    %v3106 = vpack.c.b16 %v2984, %v2982
    %v3107 = vpack.c.b16 %v2985, %v2983
    %v3108 = vpack.c.b16 %v2988, %v2986
    %v3109 = vpack.c.b16 %v2989, %v2987
    %v3110 = vpack.c.b16 %v2992, %v2990
    %v3111 = vpack.c.b16 %v2993, %v2991
    %v3112 = vpack.c.b16 %v2996, %v2994
    %v3113 = vpack.c.b16 %v2997, %v2995
    %v3114 = vpack.c.b16 %v3000, %v2998
    %v3115 = vpack.c.b16 %v3001, %v2999
    %v3116 = vpack.c.b16 %v3004, %v3002
    %v3117 = vpack.c.b16 %v3005, %v3003
    %v3118 = vpack.c.b16 %v3008, %v3006
    %v3119 = vpack.c.b16 %v3009, %v3007
    %v3120 = vpack.c.b16 %v3012, %v3010
    %v3121 = vpack.c.b16 %v3013, %v3011
    %v3122 = vpack.c.b16 %v3016, %v3014
    %v3123 = vpack.c.b16 %v3017, %v3015
    %v3124 = vpack.c.b16 %v3020, %v3018
    %v3125 = vpack.c.b16 %v3021, %v3019
    %v3126 = vpack.c.b16 %v3024, %v3022
    %v3127 = vpack.c.b16 %v3025, %v3023
    %v3128 = vpack.c.b16 %v3028, %v3026
    %v3129 = vpack.c.b16 %v3029, %v3027
    %v3130 = vpack.c.b16 %v3032, %v3030
    %v3131 = vpack.c.b16 %v3033, %v3031
    %v3132 = vpack.c.b16 %v3036, %v3034
    %v3133 = vpack.c.b16 %v3037, %v3035
    %v3134 = vpack.c.b16 %v3040, %v3038
    %v3135 = vpack.c.b16 %v3041, %v3039
    %v3136 = vpack.c.b16 %v3044, %v3042
    %v3137 = vpack.c.b16 %v3045, %v3043
    %v3138 = vpack.c.b16 %v3048, %v3046
    %v3139 = vpack.c.b16 %v3049, %v3047
    %v3140 = vpack.c.b16 %v3052, %v3050
    %v3141 = vpack.c.b16 %v3053, %v3051
    %v3142 = vpack.c.b16 %v3056, %v3054
    %v3143 = vpack.c.b16 %v3057, %v3055
    %v3144 = vpack.c.b16 %v3060, %v3058
    %v3145 = vpack.c.b16 %v3061, %v3059
    %v3146 = vpack.c.b16 %v3064, %v3062
    %v3147 = vpack.c.b16 %v3065, %v3063
    %v3148 = vpack.c.b16 %v3068, %v3066
    %v3149 = vpack.c.b16 %v3069, %v3067
    %v3150 = vpack.c.b16 %v3072, %v3070
    %v3151 = vpack.c.b16 %v3073, %v3071
    %v3152 = vpack.c.b16 %v3076, %v3074
    %v3153 = vpack.c.b16 %v3077, %v3075
    %v3154 = vpack.c.b16 %v3080, %v3078
    %v3155 = vpack.c.b16 %v3081, %v3079
    %v3156 = vpack.c.b16 %v3084, %v3082
    %v3157 = vpack.c.b16 %v3085, %v3083
    %v3158 = vpack.c.b16 %v3088, %v3086
    %v3159 = vpack.c.b16 %v3089, %v3087
    %v3160 = vpack.c.b16 %v3092, %v3090
    %v3161 = vpack.c.b16 %v3093, %v3091
    %v3162 = vpack.c.b16 %v3096, %v3094
    %v3163 = vpack.c.b16 %v3097, %v3095
    %v3164 = vpack.c.b16 %v3100, %v3098
    %v3165 = vpack.c.b16 %v3101, %v3099
    %3230 = vmatprep.subr.bf16.mxu0 %v3117
    %3231 = vmatpush1.bf16.msra.mxu0 %v3116
    %3232 = vmatprep.subr.bf16.mxu0 %v3115
    %3233 = vmatpush1.bf16.msra.mxu0 %v3114
    %3234 = vmatprep.subr.bf16.mxu0 %v3113
    %3235 = vmatpush1.bf16.msra.mxu0 %v3112
    %3236 = vmatprep.subr.bf16.mxu0 %v3111
    %3237 = vmatpush1.bf16.msra.mxu0 %v3110
    %3238 = vmatprep.subr.bf16.mxu0 %v3109
    %3239 = vmatpush1.bf16.msra.mxu0 %v3108
    %3240 = vmatprep.subr.bf16.mxu0 %v3107
    %3241 = vmatpush1.bf16.msra.mxu0 %v3106
    %3242 = vmatprep.subr.bf16.mxu0 %v3105
    %3243 = vmatpush1.bf16.msra.mxu0 %v3104
    %3244 = vmatprep.subr.bf16.mxu0 %v3103
    %3245 = vmatpush1.bf16.msra.mxu0 %v3102
    %3246 = vmatprep.subr.bf16.mxu0 %v3133
    %3247 = vmatpush2.bf16.msra.mxu0 %v3132
    %3248 = vmatprep.subr.bf16.mxu0 %v3131
    %3249 = vmatpush2.bf16.msra.mxu0 %v3130
    %3250 = vmatprep.subr.bf16.mxu0 %v3129
    %3251 = vmatpush2.bf16.msra.mxu0 %v3128
    %3252 = vmatprep.subr.bf16.mxu0 %v3127
    %3253 = vmatpush2.bf16.msra.mxu0 %v3126
    %3254 = vmatprep.subr.bf16.mxu0 %v3125
    %3255 = vmatpush2.bf16.msra.mxu0 %v3124
    %3256 = vmatprep.subr.bf16.mxu0 %v3123
    %3257 = vmatpush2.bf16.msra.mxu0 %v3122
    %3258 = vmatprep.subr.bf16.mxu0 %v3121
    %3259 = vmatpush2.bf16.msra.mxu0 %v3120
    %3260 = vmatprep.subr.bf16.mxu0 %v3119
    %3261 = vmatpush2.bf16.msra.mxu0 %v3118
    %3262 = vmatprep.mubr.bf16.mxu0 %v2827
    %3263 = vmatmul.mubr.bf16.gmra.mxu0 %v2826
    %v3264 = vpop.f32.mrf.mxu0
    %v3265 = vadd.f32 %v2903, %v3264
    %v3266 = vpop.f32.mrf.mxu0
    %v3267 = vadd.f32 %v2907, %v3266
    %v3268 = vpop.f32.mrf.mxu0
    %v3269 = vadd.f32 %v2903, %v3268
    %v3270 = vpop.f32.mrf.mxu0
    %v3271 = vadd.f32 %v2907, %v3270
    %3272 = vmatprep.mubr.bf16.mxu0 %v2831
    %3273 = vmatmul.mubr.bf16.gmra.mxu0 %v2830
    %v3274 = vpop.f32.mrf.mxu0
    %v3275 = vadd.f32 %v2903, %v3274
    %v3276 = vpop.f32.mrf.mxu0
    %v3277 = vadd.f32 %v2907, %v3276
    %v3278 = vpop.f32.mrf.mxu0
    %v3279 = vadd.f32 %v2903, %v3278
    %v3280 = vpop.f32.mrf.mxu0
    %v3281 = vadd.f32 %v2907, %v3280
    %3282 = vdwg.mxu0
    %3283 = vmatprep.subr.bf16.mxu0 %v3149
    %3284 = vmatpush1.bf16.msra.mxu0 %v3148
    %3285 = vmatprep.subr.bf16.mxu0 %v3147
    %3286 = vmatpush1.bf16.msra.mxu0 %v3146
    %3287 = vmatprep.subr.bf16.mxu0 %v3145
    %3288 = vmatpush1.bf16.msra.mxu0 %v3144
    %3289 = vmatprep.subr.bf16.mxu0 %v3143
    %3290 = vmatpush1.bf16.msra.mxu0 %v3142
    %3291 = vmatprep.subr.bf16.mxu0 %v3141
    %3292 = vmatpush1.bf16.msra.mxu0 %v3140
    %3293 = vmatprep.subr.bf16.mxu0 %v3139
    %3294 = vmatpush1.bf16.msra.mxu0 %v3138
    %3295 = vmatprep.subr.bf16.mxu0 %v3137
    %3296 = vmatpush1.bf16.msra.mxu0 %v3136
    %3297 = vmatprep.subr.bf16.mxu0 %v3135
    %3298 = vmatpush1.bf16.msra.mxu0 %v3134
    %3299 = vmatprep.subr.bf16.mxu0 %v3165
    %3300 = vmatpush2.bf16.msra.mxu0 %v3164
    %3301 = vmatprep.subr.bf16.mxu0 %v3163
    %3302 = vmatpush2.bf16.msra.mxu0 %v3162
    %3303 = vmatprep.subr.bf16.mxu0 %v3161
    %3304 = vmatpush2.bf16.msra.mxu0 %v3160
    %3305 = vmatprep.subr.bf16.mxu0 %v3159
    %3306 = vmatpush2.bf16.msra.mxu0 %v3158
    %3307 = vmatprep.subr.bf16.mxu0 %v3157
    %3308 = vmatpush2.bf16.msra.mxu0 %v3156
    %3309 = vmatprep.subr.bf16.mxu0 %v3155
    %3310 = vmatpush2.bf16.msra.mxu0 %v3154
    %3311 = vmatprep.subr.bf16.mxu0 %v3153
    %3312 = vmatpush2.bf16.msra.mxu0 %v3152
    %3313 = vmatprep.subr.bf16.mxu0 %v3151
    %3314 = vmatpush2.bf16.msra.mxu0 %v3150
    %3315 = vmatprep.mubr.bf16.mxu0 %v2829
    %3316 = vmatmul.mubr.bf16.gmra.mxu0 %v2828
    %v3317 = vpop.f32.mrf.mxu0
    %v3318 = vadd.f32 %v3265, %v3317
    %v3319 = vpop.f32.mrf.mxu0
    %v3320 = vadd.f32 %v3267, %v3319
    %v3321 = vpop.f32.mrf.mxu0
    %v3322 = vadd.f32 %v3269, %v3321
    %v3323 = vpop.f32.mrf.mxu0
    %v3324 = vadd.f32 %v3271, %v3323
    %3325 = vmatprep.mubr.bf16.mxu0 %v2833
    %3326 = vmatmul.mubr.bf16.gmra.mxu0 %v2832
    %v3327 = vpop.f32.mrf.mxu0
    %v3328 = vadd.f32 %v3275, %v3327
    %v3329 = vpop.f32.mrf.mxu0
    %v3330 = vadd.f32 %v3277, %v3329
    %v3331 = vpop.f32.mrf.mxu0
    %v3332 = vadd.f32 %v3279, %v3331
    %v3333 = vpop.f32.mrf.mxu0
    %v3334 = vadd.f32 %v3281, %v3333
    %3335 = vdwg.mxu0
    %v3336 = vmax.f32 %v3318, 0.0
    %v3337 = vmax.f32 %v3320, 0.0
    %v3338 = vmax.f32 %v3322, 0.0
    %v3339 = vmax.f32 %v3324, 0.0
    %v3340 = vmax.f32 %v3328, 0.0
    %v3341 = vmax.f32 %v3330, 0.0
    %v3342 = vmax.f32 %v3332, 0.0
    %v3343 = vmax.f32 %v3334, 0.0
    %v3344 = vpack.c.bf16 %v3338, %v3336
    %v3345 = vpack.c.bf16 %v3339, %v3337
    %v3346 = vpack.c.bf16 %v3342, %v3340
    %v3347 = vpack.c.bf16 %v3343, %v3341
    %v3348 = vld [vmem:[#allocation10] sm:$0xf]
    %v3349 = vld [vmem:[#allocation10 + $0x4] sm:$0xf]
    %v3350 = vld [vmem:[#allocation10 + $0x8] sm:$0xf]
    %v3351 = vld [vmem:[#allocation10 + $0xc] sm:$0xf]
    %v3352 = vld [vmem:[#allocation10 + $0x10] sm:$0xf]
    %v3353 = vld [vmem:[#allocation10 + $0x14] sm:$0xf]
    %v3354 = vld [vmem:[#allocation10 + $0x18] sm:$0xf]
    %v3355 = vld [vmem:[#allocation10 + $0x1c] sm:$0xf]
    %v3356 = vld [vmem:[#allocation10 + $0x20] sm:$0xf]
    %v3357 = vld [vmem:[#allocation10 + $0x24] sm:$0xf]
    %v3358 = vld [vmem:[#allocation10 + $0x28] sm:$0xf]
    %v3359 = vld [vmem:[#allocation10 + $0x2c] sm:$0xf]
    %v3360 = vld [vmem:[#allocation10 + $0x30] sm:$0xf]
    %v3361 = vld [vmem:[#allocation10 + $0x34] sm:$0xf]
    %v3362 = vld [vmem:[#allocation10 + $0x38] sm:$0xf]
    %v3363 = vld [vmem:[#allocation10 + $0x3c] sm:$0xf]
    %v3364 = vld [vmem:[#allocation10 + $0x40] sm:$0xf]
    %v3365 = vld [vmem:[#allocation10 + $0x44] sm:$0xf]
    %v3366 = vld [vmem:[#allocation10 + $0x48] sm:$0xf]
    %v3367 = vld [vmem:[#allocation10 + $0x4c] sm:$0xf]
    %v3368 = vld [vmem:[#allocation10 + $0x50] sm:$0xf]
    %v3369 = vld [vmem:[#allocation10 + $0x54] sm:$0xf]
    %v3370 = vld [vmem:[#allocation10 + $0x58] sm:$0xf]
    %v3371 = vld [vmem:[#allocation10 + $0x5c] sm:$0xf]
    %v3372 = vld [vmem:[#allocation10 + $0x60] sm:$0xf]
    %v3373 = vld [vmem:[#allocation10 + $0x64] sm:$0xf]
    %v3374 = vld [vmem:[#allocation10 + $0x68] sm:$0xf]
    %v3375 = vld [vmem:[#allocation10 + $0x6c] sm:$0xf]
    %v3376 = vld [vmem:[#allocation10 + $0x70] sm:$0xf]
    %v3377 = vld [vmem:[#allocation10 + $0x74] sm:$0xf]
    %v3378 = vld [vmem:[#allocation10 + $0x78] sm:$0xf]
    %v3379 = vld [vmem:[#allocation10 + $0x7c] sm:$0xf]
    %v3380 = vld [vmem:[%s8] sm:$0x1]
    %v3382 = vlaneseq
    %v3383 = vshrl.u32 %v3382, 7
    %v3384 = vsub.s32 0, %v3383
    %v3385 = vrot.slane %v3380, %v3384
    %v3419 = vunpack.c.l.b16 %v3348
    %v3420 = vunpack.c.l.b16 %v3349
    %v3421 = vunpack.c.l.b16 %v3350
    %v3422 = vunpack.c.l.b16 %v3351
    %v3423 = vunpack.c.l.b16 %v3352
    %v3424 = vunpack.c.l.b16 %v3353
    %v3425 = vunpack.c.l.b16 %v3354
    %v3426 = vunpack.c.l.b16 %v3355
    %v3427 = vunpack.c.l.b16 %v3356
    %v3428 = vunpack.c.l.b16 %v3357
    %v3429 = vunpack.c.l.b16 %v3358
    %v3430 = vunpack.c.l.b16 %v3359
    %v3431 = vunpack.c.l.b16 %v3360
    %v3432 = vunpack.c.l.b16 %v3361
    %v3433 = vunpack.c.l.b16 %v3362
    %v3434 = vunpack.c.l.b16 %v3363
    %v3435 = vunpack.c.l.b16 %v3364
    %v3436 = vunpack.c.l.b16 %v3365
    %v3437 = vunpack.c.l.b16 %v3366
    %v3438 = vunpack.c.l.b16 %v3367
    %v3439 = vunpack.c.l.b16 %v3368
    %v3440 = vunpack.c.l.b16 %v3369
    %v3441 = vunpack.c.l.b16 %v3370
    %v3442 = vunpack.c.l.b16 %v3371
    %v3443 = vunpack.c.l.b16 %v3372
    %v3444 = vunpack.c.l.b16 %v3373
    %v3445 = vunpack.c.l.b16 %v3374
    %v3446 = vunpack.c.l.b16 %v3375
    %v3447 = vunpack.c.l.b16 %v3376
    %v3448 = vunpack.c.l.b16 %v3377
    %v3449 = vunpack.c.l.b16 %v3378
    %v3450 = vunpack.c.l.b16 %v3379
    %v3451 = vpack.c.b16 %v3420, %v3419
    %v3452 = vpack.c.b16 %v3422, %v3421
    %v3453 = vpack.c.b16 %v3424, %v3423
    %v3454 = vpack.c.b16 %v3426, %v3425
    %v3455 = vpack.c.b16 %v3428, %v3427
    %v3456 = vpack.c.b16 %v3430, %v3429
    %v3457 = vpack.c.b16 %v3432, %v3431
    %v3458 = vpack.c.b16 %v3434, %v3433
    %v3459 = vpack.c.b16 %v3436, %v3435
    %v3460 = vpack.c.b16 %v3438, %v3437
    %v3461 = vpack.c.b16 %v3440, %v3439
    %v3462 = vpack.c.b16 %v3442, %v3441
    %v3463 = vpack.c.b16 %v3444, %v3443
    %v3464 = vpack.c.b16 %v3446, %v3445
    %v3465 = vpack.c.b16 %v3448, %v3447
    %v3466 = vpack.c.b16 %v3450, %v3449
    %3483 = vmatprep.subr.bf16.mxu0 0
    %3484 = vmatpush1.bf16.msra.mxu0 %v3458
    %3485 = vmatprep.subr.bf16.mxu0 0
    %3486 = vmatpush1.bf16.msra.mxu0 %v3457
    %3487 = vmatprep.subr.bf16.mxu0 0
    %3488 = vmatpush1.bf16.msra.mxu0 %v3456
    %3489 = vmatprep.subr.bf16.mxu0 0
    %3490 = vmatpush1.bf16.msra.mxu0 %v3455
    %3491 = vmatprep.subr.bf16.mxu0 0
    %3492 = vmatpush1.bf16.msra.mxu0 %v3454
    %3493 = vmatprep.subr.bf16.mxu0 0
    %3494 = vmatpush1.bf16.msra.mxu0 %v3453
    %3495 = vmatprep.subr.bf16.mxu0 0
    %3496 = vmatpush1.bf16.msra.mxu0 %v3452
    %3497 = vmatprep.subr.bf16.mxu0 0
    %3498 = vmatpush1.bf16.msra.mxu0 %v3451
    %3499 = vmatprep.subr.bf16.mxu0 0
    %3500 = vmatpush2.bf16.msra.mxu0 %v3466
    %3501 = vmatprep.subr.bf16.mxu0 0
    %3502 = vmatpush2.bf16.msra.mxu0 %v3465
    %3503 = vmatprep.subr.bf16.mxu0 0
    %3504 = vmatpush2.bf16.msra.mxu0 %v3464
    %3505 = vmatprep.subr.bf16.mxu0 0
    %3506 = vmatpush2.bf16.msra.mxu0 %v3463
    %3507 = vmatprep.subr.bf16.mxu0 0
    %3508 = vmatpush2.bf16.msra.mxu0 %v3462
    %3509 = vmatprep.subr.bf16.mxu0 0
    %3510 = vmatpush2.bf16.msra.mxu0 %v3461
    %3511 = vmatprep.subr.bf16.mxu0 0
    %3512 = vmatpush2.bf16.msra.mxu0 %v3460
    %3513 = vmatprep.subr.bf16.mxu0 0
    %3514 = vmatpush2.bf16.msra.mxu0 %v3459
    %3515 = vmatprep.mubr.bf16.mxu0 %v3345
    %3516 = vmatmul.mubr.bf16.gmra.mxu0 %v3344
    %v3517 = vpop.f32.mrf.mxu0
    %v3518 = vadd.f32 %v3385, %v3517
    %v3519 = vpop.f32.mrf.mxu0
    %v3520 = vpop.f32.mrf.mxu0
    %v3521 = vadd.f32 %v3385, %v3520
    %v3522 = vpop.f32.mrf.mxu0
    %3523 = vmatprep.mubr.bf16.mxu0 %v3347
    %3524 = vmatmul.mubr.bf16.gmra.mxu0 %v3346
    %v3525 = vpop.f32.mrf.mxu0
    %v3526 = vadd.f32 %v3385, %v3525
    %v3527 = vpop.f32.mrf.mxu0
    %v3528 = vpop.f32.mrf.mxu0
    %v3529 = vadd.f32 %v3385, %v3528
    %v3530 = vpop.f32.mrf.mxu0
    %3531 = vdwg.mxu0
    %3532 = vst [vmem:[%s9] sm:$0xff] %v3518
    %3533 = vst [vmem:[%s9 + $0x8] sm:$0xff] %v3521
    %3534 = vst [vmem:[%s9 + $0x10] sm:$0xff] %v3526
    %3535 = vst [vmem:[%s9 + $0x18] sm:$0xff] %v3529
    // Predicated region
    $region62: #{teacher_model_forward.1} parent=1 // pred_check
      _
    $region63: #{teacher_model_forward.1} parent=1 // pred_check_branch
      %3537 = sbr.rel (0) target = $region65
    $region64: #{teacher_model_forward.1} parent=1 // pred_region
      _
    $region65: #{teacher_model_forward.1} parent=1 // pred_fallthru
      _
    // Predicated region
    $region66: #{teacher_model_forward.1} parent=1 // pred_check
      _
    $region67: #{teacher_model_forward.1} parent=1 // pred_check_branch
      %3539 = sbr.rel (0) target = $region69
    $region68: #{teacher_model_forward.1} parent=1 // pred_region
      _
    $region69: #{teacher_model_forward.1} parent=1 // pred_fallthru
      _
    %3540 = vsyncpa [#allocation3], 1
    %3541 = vsyncpa [#allocation5], 1
    %3542 = vsyncpa [#allocation8], 1
    %3543 = vsyncpa [#allocation11], 1

</llo_original>
